<compile_context>
chip_gen: v7x
topology: tpu7x:2x2x1
jax: 0.10.0
libtpu: 0.0.40
codegen_flags: <defaults>
</compile_context>

<pallas_src>
import jax
import jax.numpy as jnp
from jax.experimental import pallas as pl
from jax.experimental.pallas import tpu as pltpu


def lstm_forecaster_kernel(
    x_ref,       # (T*B, F)   time-major rows: row t*B + b = x[b, t, :]
    wih0_ref,    # (F, 4H)
    whh0_ref,    # (H, 4H)
    b0_ref,      # (1, 4H)    b_ih_l0 + b_hh_l0
    wih1_ref,    # (H, 4H)
    whh1_ref,    # (H, 4H)
    b1_ref,      # (1, 4H)    b_ih_l1 + b_hh_l1
    wattn_ref,   # (1, H)     attention weight row (bias dropped: cancels)
    wheads_ref,  # (H, P)     6 heads concatenated, padded to P lanes
    bheads_ref,  # (1, P)
    out_ref,     # (B, P)
):
    TB, _ = x_ref.shape
    B = out_ref.shape[0]
    T = TB // B
    H = whh0_ref.shape[0]

    # --- Precompute layer-0 input projection for the whole sequence. -------
    # One (T*B, F) @ (F, 4H) matmul off the recurrent critical path; the
    # result stays in vregs and is statically sliced per unrolled step.
    pre = (
        jnp.dot(x_ref[...], wih0_ref[...], preferred_element_type=jnp.float32)
        + b0_ref[...]
    )                                                           # (T*B, 4H)

    # Hoist weight loads out of the loop.
    whh0 = whh0_ref[...]
    wih1 = wih1_ref[...]
    whh1 = whh1_ref[...]
    b1 = b1_ref[...]
    wattn = wattn_ref[...]                                      # (1, H)

    def activate(gates):
        # PyTorch gate order: input, forget, cell(g), output.
        # sigmoid(x) = 0.5*(1 + tanh(0.5*x)): one full-vreg tanh covers
        # i/f/o, one full-vreg tanh covers g -> 2 EUP pushes per layer-step.
        sg = 0.5 * (1.0 + jnp.tanh(0.5 * gates))                # (B, 4H)
        tg = jnp.tanh(gates)                                    # (B, 4H)
        i = sg[:, 0:H]
        f = sg[:, H:2 * H]
        g = tg[:, 2 * H:3 * H]
        o = sg[:, 3 * H:4 * H]
        return i, f, g, o

    h0 = c0 = h1 = c1 = None
    h1s = []
    # T is small and static: fully unroll (Python loop) so the scheduler can
    # overlap EUP transcendentals of one step with MXU work of the next.
    for t in range(T):
        # ---- state-only recurrent matmuls (depend only on prev state) -----
        rec0 = None if t == 0 else jnp.dot(
            h0, whh0, preferred_element_type=jnp.float32)
        rec1 = b1 if t == 0 else b1 + jnp.dot(
            h1, whh1, preferred_element_type=jnp.float32)

        # ---- layer 0 -------------------------------------------------------
        g0 = pre[t * B:(t + 1) * B, :]
        if rec0 is not None:
            g0 = g0 + rec0
        i0, f0, gg0, o0 = activate(g0)
        c0 = (i0 * gg0) if t == 0 else (f0 * c0 + i0 * gg0)
        h0 = o0 * jnp.tanh(c0)

        # ---- layer 1 (no concat: wih1 / whh1 kept separate) ----------------
        g1 = rec1 + jnp.dot(h0, wih1, preferred_element_type=jnp.float32)
        i1, f1, gg1, o1 = activate(g1)
        c1 = (i1 * gg1) if t == 0 else (f1 * c1 + i1 * gg1)
        h1 = o1 * jnp.tanh(c1)
        h1s.append(h1)

    # --- Deferred softmax attention over time (off the recurrent chain). ---
    logits = [jnp.sum(h * wattn, axis=-1, keepdims=True) for h in h1s]  # (B,1)
    m = logits[0]
    for t in range(1, T):
        m = jnp.maximum(m, logits[t])
    ps = [jnp.exp(lg - m) for lg in logits]
    denom = ps[0]
    ctx = ps[0] * h1s[0]
    for t in range(1, T):
        denom = denom + ps[t]
        ctx = ctx + ps[t] * h1s[t]
    context = ctx / denom                                       # (B, H)

    # Fused heads: lane-dense (B, P) output -> single full-vreg store.
    out_ref[...] = (
        jnp.dot(context, wheads_ref[...], preferred_element_type=jnp.float32)
        + bheads_ref[...]
    )


def prepare_params(params):
    """One-time parameter re-layout (hoisted out of the per-call wrapper)."""
    H = params["whh0"].shape[0]
    six_O = params["wheads"].shape[1]
    P = ((six_O + 127) // 128) * 128
    wheads_p = jnp.zeros((H, P), jnp.float32).at[:, :six_O].set(params["wheads"])
    bheads_p = jnp.zeros((1, P), jnp.float32).at[:, :six_O].set(params["bheads"])
    return {
        "wih0": params["wih0"], "whh0": params["whh0"], "b0": params["b0"],
        "wih1": params["wih1"], "whh1": params["whh1"], "b1": params["b1"],
        "wattn_row": params["wattn"].reshape(1, H),
        "wheads_p": wheads_p, "bheads_p": bheads_p,
        "six_O": six_O, "P": P, "H": H,
    }


def lstm_forecaster_forward(x, kp):
    """x: (B, T, F) batch_first, like the PyTorch module. Returns (B, O, 6)."""
    B, T, F = x.shape
    H, P, six_O = kp["H"], kp["P"], kp["six_O"]
    O = six_O // 6

    # Pad batch to a full sublane group; time-major flatten so each step's
    # precomputed gate slice is one aligned (8, 128) vreg.
    B_pad = max(8, ((B + 7) // 8) * 8)
    x_p = jnp.zeros((B_pad, T, F), jnp.float32).at[:B].set(x.astype(jnp.float32))
    x_tm = jnp.transpose(x_p, (1, 0, 2)).reshape(T * B_pad, F)

    vspec = pl.BlockSpec(memory_space=pltpu.MemorySpace.VMEM)
    out = pl.pallas_call(
        lstm_forecaster_kernel,
        out_shape=jax.ShapeDtypeStruct((B_pad, P), jnp.float32),
        in_specs=[vspec] * 10,
        out_specs=vspec,
        compiler_params=pltpu.CompilerParams(vmem_limit_bytes=4 * 1024 * 1024),
    )(x_tm,
      kp["wih0"], kp["whh0"], kp["b0"],
      kp["wih1"], kp["whh1"], kp["b1"],
      kp["wattn_row"],
      kp["wheads_p"], kp["bheads_p"])

    y = out[:B, :six_O].reshape(B, 6, O)    # torch.stack(outputs, dim=1)
    return jnp.transpose(y, (0, 2, 1))      # .permute(0, 2, 1) -> (B, O, 6)


def reference_forward(x, params):
    """Pure-JAX reference matching the PyTorch forward (eval mode)."""
    B, T, F = x.shape
    H = params["whh0"].shape[0]

    def cell(x_t, h, c, w_ih, w_hh, b):
        g = x_t @ w_ih + h @ w_hh + b
        i = jax.nn.sigmoid(g[:, 0:H])
        f = jax.nn.sigmoid(g[:, H:2 * H])
        gg = jnp.tanh(g[:, 2 * H:3 * H])
        o = jax.nn.sigmoid(g[:, 3 * H:4 * H])
        c = f * c + i * gg
        return o * jnp.tanh(c), c

    def scan_fn(carry, x_t):
        h0, c0, h1, c1 = carry
        h0, c0 = cell(x_t, h0, c0, params["wih0"], params["whh0"], params["b0"])
        h1, c1 = cell(h0, h1, c1, params["wih1"], params["whh1"], params["b1"])
        return (h0, c0, h1, c1), h1

    z = jnp.zeros((B, H), jnp.float32)
    _, seq = jax.lax.scan(scan_fn, (z, z, z, z), jnp.transpose(x, (1, 0, 2)))
    out = jnp.transpose(seq, (1, 0, 2))                       # (B, T, H)
    logits = out @ params["wattn"] + params["battn"]          # (B, T, 1)
    attn = jax.nn.softmax(logits, axis=1)
    ctx = jnp.sum(out * attn, axis=1)                         # (B, H)
    y = ctx @ params["wheads"] + params["bheads"]             # (B, 6*O)
    six_O = params["wheads"].shape[1]
    return jnp.transpose(y.reshape(B, 6, six_O // 6), (0, 2, 1))


def init_params(key, input_features, hidden_size, output_timestamps):
    F, H, O = input_features, hidden_size, output_timestamps
    ks = jax.random.split(key, 12)
    scale = 1.0 / jnp.sqrt(H)

    def u(k, shape):
        return jax.random.uniform(k, shape, jnp.float32, -scale, scale)

    return {
        # LSTM layer 0 (weights pre-transposed to (in, 4H))
        "wih0": u(ks[0], (F, 4 * H)),
        "whh0": u(ks[1], (H, 4 * H)),
        "b0": u(ks[2], (1, 4 * H)) + u(ks[3], (1, 4 * H)),   # b_ih + b_hh
        # LSTM layer 1
        "wih1": u(ks[4], (H, 4 * H)),
        "whh1": u(ks[5], (H, 4 * H)),
        "b1": u(ks[6], (1, 4 * H)) + u(ks[7], (1, 4 * H)),
        # attention_layer: Linear(H, 1)
        "wattn": u(ks[8], (H, 1)),
        "battn": u(ks[9], (1, 1)),
        # 6 heads Linear(H, O) fused: (H, 6*O)
        "wheads": u(ks[10], (H, 6 * O)),
        "bheads": u(ks[11], (1, 6 * O)),
    }


if __name__ == "__main__":
    B, T, F = 2, 8, 16          # batch, seq_len, input_features
    H, O = 32, 4                # hidden_size, output_timestamps

    key = jax.random.PRNGKey(0)
    kx, kp_key = jax.random.split(key)
    x = jax.random.normal(kx, (B, T, F), jnp.float32)
    params = init_params(kp_key, F, H, O)

    # One-time parameter re-layout (hoisted out of the per-call path).
    kparams = jax.tree_util.tree_map(
        lambda v: v, prepare_params(params))  # materialize once

    y = jax.block_until_ready(lstm_forecaster_forward(x, kparams))
    y_ref = jax.block_until_ready(reference_forward(x, params))

    assert y.shape == (B, O, 6), y.shape
    assert jnp.allclose(y, y_ref, atol=1e-4, rtol=1e-4), (
        f"max abs err {jnp.max(jnp.abs(y - y_ref))}")
    print("KERNEL_OK")
</pallas_src>

<mosaic_0001>
module attributes {stable_mosaic.version = 11 : i64} {
  func.func @lstm_forecaster_kernel(%arg0: memref<64x16xf32, #tpu.memory_space<vmem>>, %arg1: memref<16x128xf32, #tpu.memory_space<vmem>>, %arg2: memref<32x128xf32, #tpu.memory_space<vmem>>, %arg3: memref<1x128xf32, #tpu.memory_space<vmem>>, %arg4: memref<32x128xf32, #tpu.memory_space<vmem>>, %arg5: memref<32x128xf32, #tpu.memory_space<vmem>>, %arg6: memref<1x128xf32, #tpu.memory_space<vmem>>, %arg7: memref<1x32xf32, #tpu.memory_space<vmem>>, %arg8: memref<32x128xf32, #tpu.memory_space<vmem>>, %arg9: memref<1x128xf32, #tpu.memory_space<vmem>>, %arg10: memref<8x128xf32, #tpu.memory_space<vmem>>) attributes {dimension_semantics = [], scalar_prefetch = 0 : i64, scratch_operands = 0 : i64, tpu.core_type = #tpu.core_type<tc>} {
    %c0 = arith.constant 0 : index
    %c0_0 = arith.constant 0 : index
    %0 = vector.load %arg0[%c0, %c0_0] : memref<64x16xf32, #tpu.memory_space<vmem>>, vector<64x16xf32>
    %c0_1 = arith.constant 0 : index
    %c0_2 = arith.constant 0 : index
    %1 = vector.load %arg1[%c0_1, %c0_2] : memref<16x128xf32, #tpu.memory_space<vmem>>, vector<16x128xf32>
    %cst = arith.constant dense<0.000000e+00> : vector<64x128xf32>
    %2 = tpu.matmul %0, %1, %cst {dimension_numbers = #tpu.dot_dimension_numbers<[1], [0], [0], [1], [0, 0, 1, 1], [], []>} : vector<64x16xf32>, vector<16x128xf32>, vector<64x128xf32> -> vector<64x128xf32>
    %c0_3 = arith.constant 0 : index
    %c0_4 = arith.constant 0 : index
    %3 = vector.load %arg3[%c0_3, %c0_4] : memref<1x128xf32, #tpu.memory_space<vmem>>, vector<1x128xf32>
    %4 = vector.broadcast %3 : vector<1x128xf32> to vector<64x128xf32>
    %5 = arith.addf %2, %4 : vector<64x128xf32>
    %c0_5 = arith.constant 0 : index
    %c0_6 = arith.constant 0 : index
    %6 = vector.load %arg2[%c0_5, %c0_6] : memref<32x128xf32, #tpu.memory_space<vmem>>, vector<32x128xf32>
    %c0_7 = arith.constant 0 : index
    %c0_8 = arith.constant 0 : index
    %7 = vector.load %arg4[%c0_7, %c0_8] : memref<32x128xf32, #tpu.memory_space<vmem>>, vector<32x128xf32>
    %c0_9 = arith.constant 0 : index
    %c0_10 = arith.constant 0 : index
    %8 = vector.load %arg5[%c0_9, %c0_10] : memref<32x128xf32, #tpu.memory_space<vmem>>, vector<32x128xf32>
    %c0_11 = arith.constant 0 : index
    %c0_12 = arith.constant 0 : index
    %9 = vector.load %arg6[%c0_11, %c0_12] : memref<1x128xf32, #tpu.memory_space<vmem>>, vector<1x128xf32>
    %c0_13 = arith.constant 0 : index
    %c0_14 = arith.constant 0 : index
    %10 = vector.load %arg7[%c0_13, %c0_14] : memref<1x32xf32, #tpu.memory_space<vmem>>, vector<1x32xf32>
    %11 = vector.extract_strided_slice %5 {offsets = [0, 0], sizes = [8, 128], strides = [1, 1]} : vector<64x128xf32> to vector<8x128xf32>
    %cst_15 = arith.constant 5.000000e-01 : f32
    %12 = vector.broadcast %cst_15 : f32 to vector<8x128xf32>
    %13 = arith.mulf %12, %11 : vector<8x128xf32>
    %14 = math.tanh %13 : vector<8x128xf32>
    %cst_16 = arith.constant 1.000000e+00 : f32
    %15 = vector.broadcast %cst_16 : f32 to vector<8x128xf32>
    %16 = arith.addf %15, %14 : vector<8x128xf32>
    %cst_17 = arith.constant 5.000000e-01 : f32
    %17 = vector.broadcast %cst_17 : f32 to vector<8x128xf32>
    %18 = arith.mulf %17, %16 : vector<8x128xf32>
    %19 = math.tanh %11 : vector<8x128xf32>
    %20 = vector.extract_strided_slice %18 {offsets = [0, 0], sizes = [8, 32], strides = [1, 1]} : vector<8x128xf32> to vector<8x32xf32>
    %21 = vector.extract_strided_slice %19 {offsets = [0, 64], sizes = [8, 32], strides = [1, 1]} : vector<8x128xf32> to vector<8x32xf32>
    %22 = vector.extract_strided_slice %18 {offsets = [0, 96], sizes = [8, 32], strides = [1, 1]} : vector<8x128xf32> to vector<8x32xf32>
    %23 = arith.mulf %20, %21 : vector<8x32xf32>
    %24 = math.tanh %23 : vector<8x32xf32>
    %25 = arith.mulf %22, %24 : vector<8x32xf32>
    %cst_18 = arith.constant dense<0.000000e+00> : vector<8x128xf32>
    %26 = tpu.matmul %25, %7, %cst_18 {dimension_numbers = #tpu.dot_dimension_numbers<[1], [0], [0], [1], [0, 0, 1, 1], [], []>} : vector<8x32xf32>, vector<32x128xf32>, vector<8x128xf32> -> vector<8x128xf32>
    %27 = vector.broadcast %9 : vector<1x128xf32> to vector<8x128xf32>
    %28 = arith.addf %27, %26 : vector<8x128xf32>
    %cst_19 = arith.constant 5.000000e-01 : f32
    %29 = vector.broadcast %cst_19 : f32 to vector<8x128xf32>
    %30 = arith.mulf %29, %28 : vector<8x128xf32>
    %31 = math.tanh %30 : vector<8x128xf32>
    %cst_20 = arith.constant 1.000000e+00 : f32
    %32 = vector.broadcast %cst_20 : f32 to vector<8x128xf32>
    %33 = arith.addf %32, %31 : vector<8x128xf32>
    %cst_21 = arith.constant 5.000000e-01 : f32
    %34 = vector.broadcast %cst_21 : f32 to vector<8x128xf32>
    %35 = arith.mulf %34, %33 : vector<8x128xf32>
    %36 = math.tanh %28 : vector<8x128xf32>
    %37 = vector.extract_strided_slice %35 {offsets = [0, 0], sizes = [8, 32], strides = [1, 1]} : vector<8x128xf32> to vector<8x32xf32>
    %38 = vector.extract_strided_slice %36 {offsets = [0, 64], sizes = [8, 32], strides = [1, 1]} : vector<8x128xf32> to vector<8x32xf32>
    %39 = vector.extract_strided_slice %35 {offsets = [0, 96], sizes = [8, 32], strides = [1, 1]} : vector<8x128xf32> to vector<8x32xf32>
    %40 = arith.mulf %37, %38 : vector<8x32xf32>
    %41 = math.tanh %40 : vector<8x32xf32>
    %42 = arith.mulf %39, %41 : vector<8x32xf32>
    %cst_22 = arith.constant dense<0.000000e+00> : vector<8x128xf32>
    %43 = tpu.matmul %25, %6, %cst_22 {dimension_numbers = #tpu.dot_dimension_numbers<[1], [0], [0], [1], [0, 0, 1, 1], [], []>} : vector<8x32xf32>, vector<32x128xf32>, vector<8x128xf32> -> vector<8x128xf32>
    %cst_23 = arith.constant dense<0.000000e+00> : vector<8x128xf32>
    %44 = tpu.matmul %42, %8, %cst_23 {dimension_numbers = #tpu.dot_dimension_numbers<[1], [0], [0], [1], [0, 0, 1, 1], [], []>} : vector<8x32xf32>, vector<32x128xf32>, vector<8x128xf32> -> vector<8x128xf32>
    %45 = vector.broadcast %9 : vector<1x128xf32> to vector<8x128xf32>
    %46 = arith.addf %45, %44 : vector<8x128xf32>
    %47 = vector.extract_strided_slice %5 {offsets = [8, 0], sizes = [8, 128], strides = [1, 1]} : vector<64x128xf32> to vector<8x128xf32>
    %48 = arith.addf %47, %43 : vector<8x128xf32>
    %cst_24 = arith.constant 5.000000e-01 : f32
    %49 = vector.broadcast %cst_24 : f32 to vector<8x128xf32>
    %50 = arith.mulf %49, %48 : vector<8x128xf32>
    %51 = math.tanh %50 : vector<8x128xf32>
    %cst_25 = arith.constant 1.000000e+00 : f32
    %52 = vector.broadcast %cst_25 : f32 to vector<8x128xf32>
    %53 = arith.addf %52, %51 : vector<8x128xf32>
    %cst_26 = arith.constant 5.000000e-01 : f32
    %54 = vector.broadcast %cst_26 : f32 to vector<8x128xf32>
    %55 = arith.mulf %54, %53 : vector<8x128xf32>
    %56 = math.tanh %48 : vector<8x128xf32>
    %57 = vector.extract_strided_slice %55 {offsets = [0, 0], sizes = [8, 32], strides = [1, 1]} : vector<8x128xf32> to vector<8x32xf32>
    %58 = vector.extract_strided_slice %55 {offsets = [0, 32], sizes = [8, 32], strides = [1, 1]} : vector<8x128xf32> to vector<8x32xf32>
    %59 = vector.extract_strided_slice %56 {offsets = [0, 64], sizes = [8, 32], strides = [1, 1]} : vector<8x128xf32> to vector<8x32xf32>
    %60 = vector.extract_strided_slice %55 {offsets = [0, 96], sizes = [8, 32], strides = [1, 1]} : vector<8x128xf32> to vector<8x32xf32>
    %61 = arith.mulf %58, %23 : vector<8x32xf32>
    %62 = arith.mulf %57, %59 : vector<8x32xf32>
    %63 = arith.addf %61, %62 : vector<8x32xf32>
    %64 = math.tanh %63 : vector<8x32xf32>
    %65 = arith.mulf %60, %64 : vector<8x32xf32>
    %cst_27 = arith.constant dense<0.000000e+00> : vector<8x128xf32>
    %66 = tpu.matmul %65, %7, %cst_27 {dimension_numbers = #tpu.dot_dimension_numbers<[1], [0], [0], [1], [0, 0, 1, 1], [], []>} : vector<8x32xf32>, vector<32x128xf32>, vector<8x128xf32> -> vector<8x128xf32>
    %67 = arith.addf %46, %66 : vector<8x128xf32>
    %cst_28 = arith.constant 5.000000e-01 : f32
    %68 = vector.broadcast %cst_28 : f32 to vector<8x128xf32>
    %69 = arith.mulf %68, %67 : vector<8x128xf32>
    %70 = math.tanh %69 : vector<8x128xf32>
    %cst_29 = arith.constant 1.000000e+00 : f32
    %71 = vector.broadcast %cst_29 : f32 to vector<8x128xf32>
    %72 = arith.addf %71, %70 : vector<8x128xf32>
    %cst_30 = arith.constant 5.000000e-01 : f32
    %73 = vector.broadcast %cst_30 : f32 to vector<8x128xf32>
    %74 = arith.mulf %73, %72 : vector<8x128xf32>
    %75 = math.tanh %67 : vector<8x128xf32>
    %76 = vector.extract_strided_slice %74 {offsets = [0, 0], sizes = [8, 32], strides = [1, 1]} : vector<8x128xf32> to vector<8x32xf32>
    %77 = vector.extract_strided_slice %74 {offsets = [0, 32], sizes = [8, 32], strides = [1, 1]} : vector<8x128xf32> to vector<8x32xf32>
    %78 = vector.extract_strided_slice %75 {offsets = [0, 64], sizes = [8, 32], strides = [1, 1]} : vector<8x128xf32> to vector<8x32xf32>
    %79 = vector.extract_strided_slice %74 {offsets = [0, 96], sizes = [8, 32], strides = [1, 1]} : vector<8x128xf32> to vector<8x32xf32>
    %80 = arith.mulf %77, %40 : vector<8x32xf32>
    %81 = arith.mulf %76, %78 : vector<8x32xf32>
    %82 = arith.addf %80, %81 : vector<8x32xf32>
    %83 = math.tanh %82 : vector<8x32xf32>
    %84 = arith.mulf %79, %83 : vector<8x32xf32>
    %cst_31 = arith.constant dense<0.000000e+00> : vector<8x128xf32>
    %85 = tpu.matmul %65, %6, %cst_31 {dimension_numbers = #tpu.dot_dimension_numbers<[1], [0], [0], [1], [0, 0, 1, 1], [], []>} : vector<8x32xf32>, vector<32x128xf32>, vector<8x128xf32> -> vector<8x128xf32>
    %cst_32 = arith.constant dense<0.000000e+00> : vector<8x128xf32>
    %86 = tpu.matmul %84, %8, %cst_32 {dimension_numbers = #tpu.dot_dimension_numbers<[1], [0], [0], [1], [0, 0, 1, 1], [], []>} : vector<8x32xf32>, vector<32x128xf32>, vector<8x128xf32> -> vector<8x128xf32>
    %87 = vector.broadcast %9 : vector<1x128xf32> to vector<8x128xf32>
    %88 = arith.addf %87, %86 : vector<8x128xf32>
    %89 = vector.extract_strided_slice %5 {offsets = [16, 0], sizes = [8, 128], strides = [1, 1]} : vector<64x128xf32> to vector<8x128xf32>
    %90 = arith.addf %89, %85 : vector<8x128xf32>
    %cst_33 = arith.constant 5.000000e-01 : f32
    %91 = vector.broadcast %cst_33 : f32 to vector<8x128xf32>
    %92 = arith.mulf %91, %90 : vector<8x128xf32>
    %93 = math.tanh %92 : vector<8x128xf32>
    %cst_34 = arith.constant 1.000000e+00 : f32
    %94 = vector.broadcast %cst_34 : f32 to vector<8x128xf32>
    %95 = arith.addf %94, %93 : vector<8x128xf32>
    %cst_35 = arith.constant 5.000000e-01 : f32
    %96 = vector.broadcast %cst_35 : f32 to vector<8x128xf32>
    %97 = arith.mulf %96, %95 : vector<8x128xf32>
    %98 = math.tanh %90 : vector<8x128xf32>
    %99 = vector.extract_strided_slice %97 {offsets = [0, 0], sizes = [8, 32], strides = [1, 1]} : vector<8x128xf32> to vector<8x32xf32>
    %100 = vector.extract_strided_slice %97 {offsets = [0, 32], sizes = [8, 32], strides = [1, 1]} : vector<8x128xf32> to vector<8x32xf32>
    %101 = vector.extract_strided_slice %98 {offsets = [0, 64], sizes = [8, 32], strides = [1, 1]} : vector<8x128xf32> to vector<8x32xf32>
    %102 = vector.extract_strided_slice %97 {offsets = [0, 96], sizes = [8, 32], strides = [1, 1]} : vector<8x128xf32> to vector<8x32xf32>
    %103 = arith.mulf %100, %63 : vector<8x32xf32>
    %104 = arith.mulf %99, %101 : vector<8x32xf32>
    %105 = arith.addf %103, %104 : vector<8x32xf32>
    %106 = math.tanh %105 : vector<8x32xf32>
    %107 = arith.mulf %102, %106 : vector<8x32xf32>
    %cst_36 = arith.constant dense<0.000000e+00> : vector<8x128xf32>
    %108 = tpu.matmul %107, %7, %cst_36 {dimension_numbers = #tpu.dot_dimension_numbers<[1], [0], [0], [1], [0, 0, 1, 1], [], []>} : vector<8x32xf32>, vector<32x128xf32>, vector<8x128xf32> -> vector<8x128xf32>
    %109 = arith.addf %88, %108 : vector<8x128xf32>
    %cst_37 = arith.constant 5.000000e-01 : f32
    %110 = vector.broadcast %cst_37 : f32 to vector<8x128xf32>
    %111 = arith.mulf %110, %109 : vector<8x128xf32>
    %112 = math.tanh %111 : vector<8x128xf32>
    %cst_38 = arith.constant 1.000000e+00 : f32
    %113 = vector.broadcast %cst_38 : f32 to vector<8x128xf32>
    %114 = arith.addf %113, %112 : vector<8x128xf32>
    %cst_39 = arith.constant 5.000000e-01 : f32
    %115 = vector.broadcast %cst_39 : f32 to vector<8x128xf32>
    %116 = arith.mulf %115, %114 : vector<8x128xf32>
    %117 = math.tanh %109 : vector<8x128xf32>
    %118 = vector.extract_strided_slice %116 {offsets = [0, 0], sizes = [8, 32], strides = [1, 1]} : vector<8x128xf32> to vector<8x32xf32>
    %119 = vector.extract_strided_slice %116 {offsets = [0, 32], sizes = [8, 32], strides = [1, 1]} : vector<8x128xf32> to vector<8x32xf32>
    %120 = vector.extract_strided_slice %117 {offsets = [0, 64], sizes = [8, 32], strides = [1, 1]} : vector<8x128xf32> to vector<8x32xf32>
    %121 = vector.extract_strided_slice %116 {offsets = [0, 96], sizes = [8, 32], strides = [1, 1]} : vector<8x128xf32> to vector<8x32xf32>
    %122 = arith.mulf %119, %82 : vector<8x32xf32>
    %123 = arith.mulf %118, %120 : vector<8x32xf32>
    %124 = arith.addf %122, %123 : vector<8x32xf32>
    %125 = math.tanh %124 : vector<8x32xf32>
    %126 = arith.mulf %121, %125 : vector<8x32xf32>
    %cst_40 = arith.constant dense<0.000000e+00> : vector<8x128xf32>
    %127 = tpu.matmul %107, %6, %cst_40 {dimension_numbers = #tpu.dot_dimension_numbers<[1], [0], [0], [1], [0, 0, 1, 1], [], []>} : vector<8x32xf32>, vector<32x128xf32>, vector<8x128xf32> -> vector<8x128xf32>
    %cst_41 = arith.constant dense<0.000000e+00> : vector<8x128xf32>
    %128 = tpu.matmul %126, %8, %cst_41 {dimension_numbers = #tpu.dot_dimension_numbers<[1], [0], [0], [1], [0, 0, 1, 1], [], []>} : vector<8x32xf32>, vector<32x128xf32>, vector<8x128xf32> -> vector<8x128xf32>
    %129 = vector.broadcast %9 : vector<1x128xf32> to vector<8x128xf32>
    %130 = arith.addf %129, %128 : vector<8x128xf32>
    %131 = vector.extract_strided_slice %5 {offsets = [24, 0], sizes = [8, 128], strides = [1, 1]} : vector<64x128xf32> to vector<8x128xf32>
    %132 = arith.addf %131, %127 : vector<8x128xf32>
    %cst_42 = arith.constant 5.000000e-01 : f32
    %133 = vector.broadcast %cst_42 : f32 to vector<8x128xf32>
    %134 = arith.mulf %133, %132 : vector<8x128xf32>
    %135 = math.tanh %134 : vector<8x128xf32>
    %cst_43 = arith.constant 1.000000e+00 : f32
    %136 = vector.broadcast %cst_43 : f32 to vector<8x128xf32>
    %137 = arith.addf %136, %135 : vector<8x128xf32>
    %cst_44 = arith.constant 5.000000e-01 : f32
    %138 = vector.broadcast %cst_44 : f32 to vector<8x128xf32>
    %139 = arith.mulf %138, %137 : vector<8x128xf32>
    %140 = math.tanh %132 : vector<8x128xf32>
    %141 = vector.extract_strided_slice %139 {offsets = [0, 0], sizes = [8, 32], strides = [1, 1]} : vector<8x128xf32> to vector<8x32xf32>
    %142 = vector.extract_strided_slice %139 {offsets = [0, 32], sizes = [8, 32], strides = [1, 1]} : vector<8x128xf32> to vector<8x32xf32>
    %143 = vector.extract_strided_slice %140 {offsets = [0, 64], sizes = [8, 32], strides = [1, 1]} : vector<8x128xf32> to vector<8x32xf32>
    %144 = vector.extract_strided_slice %139 {offsets = [0, 96], sizes = [8, 32], strides = [1, 1]} : vector<8x128xf32> to vector<8x32xf32>
    %145 = arith.mulf %142, %105 : vector<8x32xf32>
    %146 = arith.mulf %141, %143 : vector<8x32xf32>
    %147 = arith.addf %145, %146 : vector<8x32xf32>
    %148 = math.tanh %147 : vector<8x32xf32>
    %149 = arith.mulf %144, %148 : vector<8x32xf32>
    %cst_45 = arith.constant dense<0.000000e+00> : vector<8x128xf32>
    %150 = tpu.matmul %149, %7, %cst_45 {dimension_numbers = #tpu.dot_dimension_numbers<[1], [0], [0], [1], [0, 0, 1, 1], [], []>} : vector<8x32xf32>, vector<32x128xf32>, vector<8x128xf32> -> vector<8x128xf32>
    %151 = arith.addf %130, %150 : vector<8x128xf32>
    %cst_46 = arith.constant 5.000000e-01 : f32
    %152 = vector.broadcast %cst_46 : f32 to vector<8x128xf32>
    %153 = arith.mulf %152, %151 : vector<8x128xf32>
    %154 = math.tanh %153 : vector<8x128xf32>
    %cst_47 = arith.constant 1.000000e+00 : f32
    %155 = vector.broadcast %cst_47 : f32 to vector<8x128xf32>
    %156 = arith.addf %155, %154 : vector<8x128xf32>
    %cst_48 = arith.constant 5.000000e-01 : f32
    %157 = vector.broadcast %cst_48 : f32 to vector<8x128xf32>
    %158 = arith.mulf %157, %156 : vector<8x128xf32>
    %159 = math.tanh %151 : vector<8x128xf32>
    %160 = vector.extract_strided_slice %158 {offsets = [0, 0], sizes = [8, 32], strides = [1, 1]} : vector<8x128xf32> to vector<8x32xf32>
    %161 = vector.extract_strided_slice %158 {offsets = [0, 32], sizes = [8, 32], strides = [1, 1]} : vector<8x128xf32> to vector<8x32xf32>
    %162 = vector.extract_strided_slice %159 {offsets = [0, 64], sizes = [8, 32], strides = [1, 1]} : vector<8x128xf32> to vector<8x32xf32>
    %163 = vector.extract_strided_slice %158 {offsets = [0, 96], sizes = [8, 32], strides = [1, 1]} : vector<8x128xf32> to vector<8x32xf32>
    %164 = arith.mulf %161, %124 : vector<8x32xf32>
    %165 = arith.mulf %160, %162 : vector<8x32xf32>
    %166 = arith.addf %164, %165 : vector<8x32xf32>
    %167 = math.tanh %166 : vector<8x32xf32>
    %168 = arith.mulf %163, %167 : vector<8x32xf32>
    %cst_49 = arith.constant dense<0.000000e+00> : vector<8x128xf32>
    %169 = tpu.matmul %149, %6, %cst_49 {dimension_numbers = #tpu.dot_dimension_numbers<[1], [0], [0], [1], [0, 0, 1, 1], [], []>} : vector<8x32xf32>, vector<32x128xf32>, vector<8x128xf32> -> vector<8x128xf32>
    %cst_50 = arith.constant dense<0.000000e+00> : vector<8x128xf32>
    %170 = tpu.matmul %168, %8, %cst_50 {dimension_numbers = #tpu.dot_dimension_numbers<[1], [0], [0], [1], [0, 0, 1, 1], [], []>} : vector<8x32xf32>, vector<32x128xf32>, vector<8x128xf32> -> vector<8x128xf32>
    %171 = vector.broadcast %9 : vector<1x128xf32> to vector<8x128xf32>
    %172 = arith.addf %171, %170 : vector<8x128xf32>
    %173 = vector.extract_strided_slice %5 {offsets = [32, 0], sizes = [8, 128], strides = [1, 1]} : vector<64x128xf32> to vector<8x128xf32>
    %174 = arith.addf %173, %169 : vector<8x128xf32>
    %cst_51 = arith.constant 5.000000e-01 : f32
    %175 = vector.broadcast %cst_51 : f32 to vector<8x128xf32>
    %176 = arith.mulf %175, %174 : vector<8x128xf32>
    %177 = math.tanh %176 : vector<8x128xf32>
    %cst_52 = arith.constant 1.000000e+00 : f32
    %178 = vector.broadcast %cst_52 : f32 to vector<8x128xf32>
    %179 = arith.addf %178, %177 : vector<8x128xf32>
    %cst_53 = arith.constant 5.000000e-01 : f32
    %180 = vector.broadcast %cst_53 : f32 to vector<8x128xf32>
    %181 = arith.mulf %180, %179 : vector<8x128xf32>
    %182 = math.tanh %174 : vector<8x128xf32>
    %183 = vector.extract_strided_slice %181 {offsets = [0, 0], sizes = [8, 32], strides = [1, 1]} : vector<8x128xf32> to vector<8x32xf32>
    %184 = vector.extract_strided_slice %181 {offsets = [0, 32], sizes = [8, 32], strides = [1, 1]} : vector<8x128xf32> to vector<8x32xf32>
    %185 = vector.extract_strided_slice %182 {offsets = [0, 64], sizes = [8, 32], strides = [1, 1]} : vector<8x128xf32> to vector<8x32xf32>
    %186 = vector.extract_strided_slice %181 {offsets = [0, 96], sizes = [8, 32], strides = [1, 1]} : vector<8x128xf32> to vector<8x32xf32>
    %187 = arith.mulf %184, %147 : vector<8x32xf32>
    %188 = arith.mulf %183, %185 : vector<8x32xf32>
    %189 = arith.addf %187, %188 : vector<8x32xf32>
    %190 = math.tanh %189 : vector<8x32xf32>
    %191 = arith.mulf %186, %190 : vector<8x32xf32>
    %cst_54 = arith.constant dense<0.000000e+00> : vector<8x128xf32>
    %192 = tpu.matmul %191, %7, %cst_54 {dimension_numbers = #tpu.dot_dimension_numbers<[1], [0], [0], [1], [0, 0, 1, 1], [], []>} : vector<8x32xf32>, vector<32x128xf32>, vector<8x128xf32> -> vector<8x128xf32>
    %193 = arith.addf %172, %192 : vector<8x128xf32>
    %cst_55 = arith.constant 5.000000e-01 : f32
    %194 = vector.broadcast %cst_55 : f32 to vector<8x128xf32>
    %195 = arith.mulf %194, %193 : vector<8x128xf32>
    %196 = math.tanh %195 : vector<8x128xf32>
    %cst_56 = arith.constant 1.000000e+00 : f32
    %197 = vector.broadcast %cst_56 : f32 to vector<8x128xf32>
    %198 = arith.addf %197, %196 : vector<8x128xf32>
    %cst_57 = arith.constant 5.000000e-01 : f32
    %199 = vector.broadcast %cst_57 : f32 to vector<8x128xf32>
    %200 = arith.mulf %199, %198 : vector<8x128xf32>
    %201 = math.tanh %193 : vector<8x128xf32>
    %202 = vector.extract_strided_slice %200 {offsets = [0, 0], sizes = [8, 32], strides = [1, 1]} : vector<8x128xf32> to vector<8x32xf32>
    %203 = vector.extract_strided_slice %200 {offsets = [0, 32], sizes = [8, 32], strides = [1, 1]} : vector<8x128xf32> to vector<8x32xf32>
    %204 = vector.extract_strided_slice %201 {offsets = [0, 64], sizes = [8, 32], strides = [1, 1]} : vector<8x128xf32> to vector<8x32xf32>
    %205 = vector.extract_strided_slice %200 {offsets = [0, 96], sizes = [8, 32], strides = [1, 1]} : vector<8x128xf32> to vector<8x32xf32>
    %206 = arith.mulf %203, %166 : vector<8x32xf32>
    %207 = arith.mulf %202, %204 : vector<8x32xf32>
    %208 = arith.addf %206, %207 : vector<8x32xf32>
    %209 = math.tanh %208 : vector<8x32xf32>
    %210 = arith.mulf %205, %209 : vector<8x32xf32>
    %cst_58 = arith.constant dense<0.000000e+00> : vector<8x128xf32>
    %211 = tpu.matmul %191, %6, %cst_58 {dimension_numbers = #tpu.dot_dimension_numbers<[1], [0], [0], [1], [0, 0, 1, 1], [], []>} : vector<8x32xf32>, vector<32x128xf32>, vector<8x128xf32> -> vector<8x128xf32>
    %cst_59 = arith.constant dense<0.000000e+00> : vector<8x128xf32>
    %212 = tpu.matmul %210, %8, %cst_59 {dimension_numbers = #tpu.dot_dimension_numbers<[1], [0], [0], [1], [0, 0, 1, 1], [], []>} : vector<8x32xf32>, vector<32x128xf32>, vector<8x128xf32> -> vector<8x128xf32>
    %213 = vector.broadcast %9 : vector<1x128xf32> to vector<8x128xf32>
    %214 = arith.addf %213, %212 : vector<8x128xf32>
    %215 = vector.extract_strided_slice %5 {offsets = [40, 0], sizes = [8, 128], strides = [1, 1]} : vector<64x128xf32> to vector<8x128xf32>
    %216 = arith.addf %215, %211 : vector<8x128xf32>
    %cst_60 = arith.constant 5.000000e-01 : f32
    %217 = vector.broadcast %cst_60 : f32 to vector<8x128xf32>
    %218 = arith.mulf %217, %216 : vector<8x128xf32>
    %219 = math.tanh %218 : vector<8x128xf32>
    %cst_61 = arith.constant 1.000000e+00 : f32
    %220 = vector.broadcast %cst_61 : f32 to vector<8x128xf32>
    %221 = arith.addf %220, %219 : vector<8x128xf32>
    %cst_62 = arith.constant 5.000000e-01 : f32
    %222 = vector.broadcast %cst_62 : f32 to vector<8x128xf32>
    %223 = arith.mulf %222, %221 : vector<8x128xf32>
    %224 = math.tanh %216 : vector<8x128xf32>
    %225 = vector.extract_strided_slice %223 {offsets = [0, 0], sizes = [8, 32], strides = [1, 1]} : vector<8x128xf32> to vector<8x32xf32>
    %226 = vector.extract_strided_slice %223 {offsets = [0, 32], sizes = [8, 32], strides = [1, 1]} : vector<8x128xf32> to vector<8x32xf32>
    %227 = vector.extract_strided_slice %224 {offsets = [0, 64], sizes = [8, 32], strides = [1, 1]} : vector<8x128xf32> to vector<8x32xf32>
    %228 = vector.extract_strided_slice %223 {offsets = [0, 96], sizes = [8, 32], strides = [1, 1]} : vector<8x128xf32> to vector<8x32xf32>
    %229 = arith.mulf %226, %189 : vector<8x32xf32>
    %230 = arith.mulf %225, %227 : vector<8x32xf32>
    %231 = arith.addf %229, %230 : vector<8x32xf32>
    %232 = math.tanh %231 : vector<8x32xf32>
    %233 = arith.mulf %228, %232 : vector<8x32xf32>
    %cst_63 = arith.constant dense<0.000000e+00> : vector<8x128xf32>
    %234 = tpu.matmul %233, %7, %cst_63 {dimension_numbers = #tpu.dot_dimension_numbers<[1], [0], [0], [1], [0, 0, 1, 1], [], []>} : vector<8x32xf32>, vector<32x128xf32>, vector<8x128xf32> -> vector<8x128xf32>
    %235 = arith.addf %214, %234 : vector<8x128xf32>
    %cst_64 = arith.constant 5.000000e-01 : f32
    %236 = vector.broadcast %cst_64 : f32 to vector<8x128xf32>
    %237 = arith.mulf %236, %235 : vector<8x128xf32>
    %238 = math.tanh %237 : vector<8x128xf32>
    %cst_65 = arith.constant 1.000000e+00 : f32
    %239 = vector.broadcast %cst_65 : f32 to vector<8x128xf32>
    %240 = arith.addf %239, %238 : vector<8x128xf32>
    %cst_66 = arith.constant 5.000000e-01 : f32
    %241 = vector.broadcast %cst_66 : f32 to vector<8x128xf32>
    %242 = arith.mulf %241, %240 : vector<8x128xf32>
    %243 = math.tanh %235 : vector<8x128xf32>
    %244 = vector.extract_strided_slice %242 {offsets = [0, 0], sizes = [8, 32], strides = [1, 1]} : vector<8x128xf32> to vector<8x32xf32>
    %245 = vector.extract_strided_slice %242 {offsets = [0, 32], sizes = [8, 32], strides = [1, 1]} : vector<8x128xf32> to vector<8x32xf32>
    %246 = vector.extract_strided_slice %243 {offsets = [0, 64], sizes = [8, 32], strides = [1, 1]} : vector<8x128xf32> to vector<8x32xf32>
    %247 = vector.extract_strided_slice %242 {offsets = [0, 96], sizes = [8, 32], strides = [1, 1]} : vector<8x128xf32> to vector<8x32xf32>
    %248 = arith.mulf %245, %208 : vector<8x32xf32>
    %249 = arith.mulf %244, %246 : vector<8x32xf32>
    %250 = arith.addf %248, %249 : vector<8x32xf32>
    %251 = math.tanh %250 : vector<8x32xf32>
    %252 = arith.mulf %247, %251 : vector<8x32xf32>
    %cst_67 = arith.constant dense<0.000000e+00> : vector<8x128xf32>
    %253 = tpu.matmul %233, %6, %cst_67 {dimension_numbers = #tpu.dot_dimension_numbers<[1], [0], [0], [1], [0, 0, 1, 1], [], []>} : vector<8x32xf32>, vector<32x128xf32>, vector<8x128xf32> -> vector<8x128xf32>
    %cst_68 = arith.constant dense<0.000000e+00> : vector<8x128xf32>
    %254 = tpu.matmul %252, %8, %cst_68 {dimension_numbers = #tpu.dot_dimension_numbers<[1], [0], [0], [1], [0, 0, 1, 1], [], []>} : vector<8x32xf32>, vector<32x128xf32>, vector<8x128xf32> -> vector<8x128xf32>
    %255 = vector.broadcast %9 : vector<1x128xf32> to vector<8x128xf32>
    %256 = arith.addf %255, %254 : vector<8x128xf32>
    %257 = vector.extract_strided_slice %5 {offsets = [48, 0], sizes = [8, 128], strides = [1, 1]} : vector<64x128xf32> to vector<8x128xf32>
    %258 = arith.addf %257, %253 : vector<8x128xf32>
    %cst_69 = arith.constant 5.000000e-01 : f32
    %259 = vector.broadcast %cst_69 : f32 to vector<8x128xf32>
    %260 = arith.mulf %259, %258 : vector<8x128xf32>
    %261 = math.tanh %260 : vector<8x128xf32>
    %cst_70 = arith.constant 1.000000e+00 : f32
    %262 = vector.broadcast %cst_70 : f32 to vector<8x128xf32>
    %263 = arith.addf %262, %261 : vector<8x128xf32>
    %cst_71 = arith.constant 5.000000e-01 : f32
    %264 = vector.broadcast %cst_71 : f32 to vector<8x128xf32>
    %265 = arith.mulf %264, %263 : vector<8x128xf32>
    %266 = math.tanh %258 : vector<8x128xf32>
    %267 = vector.extract_strided_slice %265 {offsets = [0, 0], sizes = [8, 32], strides = [1, 1]} : vector<8x128xf32> to vector<8x32xf32>
    %268 = vector.extract_strided_slice %265 {offsets = [0, 32], sizes = [8, 32], strides = [1, 1]} : vector<8x128xf32> to vector<8x32xf32>
    %269 = vector.extract_strided_slice %266 {offsets = [0, 64], sizes = [8, 32], strides = [1, 1]} : vector<8x128xf32> to vector<8x32xf32>
    %270 = vector.extract_strided_slice %265 {offsets = [0, 96], sizes = [8, 32], strides = [1, 1]} : vector<8x128xf32> to vector<8x32xf32>
    %271 = arith.mulf %268, %231 : vector<8x32xf32>
    %272 = arith.mulf %267, %269 : vector<8x32xf32>
    %273 = arith.addf %271, %272 : vector<8x32xf32>
    %274 = math.tanh %273 : vector<8x32xf32>
    %275 = arith.mulf %270, %274 : vector<8x32xf32>
    %cst_72 = arith.constant dense<0.000000e+00> : vector<8x128xf32>
    %276 = tpu.matmul %275, %7, %cst_72 {dimension_numbers = #tpu.dot_dimension_numbers<[1], [0], [0], [1], [0, 0, 1, 1], [], []>} : vector<8x32xf32>, vector<32x128xf32>, vector<8x128xf32> -> vector<8x128xf32>
    %277 = arith.addf %256, %276 : vector<8x128xf32>
    %cst_73 = arith.constant 5.000000e-01 : f32
    %278 = vector.broadcast %cst_73 : f32 to vector<8x128xf32>
    %279 = arith.mulf %278, %277 : vector<8x128xf32>
    %280 = math.tanh %279 : vector<8x128xf32>
    %cst_74 = arith.constant 1.000000e+00 : f32
    %281 = vector.broadcast %cst_74 : f32 to vector<8x128xf32>
    %282 = arith.addf %281, %280 : vector<8x128xf32>
    %cst_75 = arith.constant 5.000000e-01 : f32
    %283 = vector.broadcast %cst_75 : f32 to vector<8x128xf32>
    %284 = arith.mulf %283, %282 : vector<8x128xf32>
    %285 = math.tanh %277 : vector<8x128xf32>
    %286 = vector.extract_strided_slice %284 {offsets = [0, 0], sizes = [8, 32], strides = [1, 1]} : vector<8x128xf32> to vector<8x32xf32>
    %287 = vector.extract_strided_slice %284 {offsets = [0, 32], sizes = [8, 32], strides = [1, 1]} : vector<8x128xf32> to vector<8x32xf32>
    %288 = vector.extract_strided_slice %285 {offsets = [0, 64], sizes = [8, 32], strides = [1, 1]} : vector<8x128xf32> to vector<8x32xf32>
    %289 = vector.extract_strided_slice %284 {offsets = [0, 96], sizes = [8, 32], strides = [1, 1]} : vector<8x128xf32> to vector<8x32xf32>
    %290 = arith.mulf %287, %250 : vector<8x32xf32>
    %291 = arith.mulf %286, %288 : vector<8x32xf32>
    %292 = arith.addf %290, %291 : vector<8x32xf32>
    %293 = math.tanh %292 : vector<8x32xf32>
    %294 = arith.mulf %289, %293 : vector<8x32xf32>
    %cst_76 = arith.constant dense<0.000000e+00> : vector<8x128xf32>
    %295 = tpu.matmul %275, %6, %cst_76 {dimension_numbers = #tpu.dot_dimension_numbers<[1], [0], [0], [1], [0, 0, 1, 1], [], []>} : vector<8x32xf32>, vector<32x128xf32>, vector<8x128xf32> -> vector<8x128xf32>
    %cst_77 = arith.constant dense<0.000000e+00> : vector<8x128xf32>
    %296 = tpu.matmul %294, %8, %cst_77 {dimension_numbers = #tpu.dot_dimension_numbers<[1], [0], [0], [1], [0, 0, 1, 1], [], []>} : vector<8x32xf32>, vector<32x128xf32>, vector<8x128xf32> -> vector<8x128xf32>
    %297 = vector.broadcast %9 : vector<1x128xf32> to vector<8x128xf32>
    %298 = arith.addf %297, %296 : vector<8x128xf32>
    %299 = vector.extract_strided_slice %5 {offsets = [56, 0], sizes = [8, 128], strides = [1, 1]} : vector<64x128xf32> to vector<8x128xf32>
    %300 = arith.addf %299, %295 : vector<8x128xf32>
    %cst_78 = arith.constant 5.000000e-01 : f32
    %301 = vector.broadcast %cst_78 : f32 to vector<8x128xf32>
    %302 = arith.mulf %301, %300 : vector<8x128xf32>
    %303 = math.tanh %302 : vector<8x128xf32>
    %cst_79 = arith.constant 1.000000e+00 : f32
    %304 = vector.broadcast %cst_79 : f32 to vector<8x128xf32>
    %305 = arith.addf %304, %303 : vector<8x128xf32>
    %cst_80 = arith.constant 5.000000e-01 : f32
    %306 = vector.broadcast %cst_80 : f32 to vector<8x128xf32>
    %307 = arith.mulf %306, %305 : vector<8x128xf32>
    %308 = math.tanh %300 : vector<8x128xf32>
    %309 = vector.extract_strided_slice %307 {offsets = [0, 0], sizes = [8, 32], strides = [1, 1]} : vector<8x128xf32> to vector<8x32xf32>
    %310 = vector.extract_strided_slice %307 {offsets = [0, 32], sizes = [8, 32], strides = [1, 1]} : vector<8x128xf32> to vector<8x32xf32>
    %311 = vector.extract_strided_slice %308 {offsets = [0, 64], sizes = [8, 32], strides = [1, 1]} : vector<8x128xf32> to vector<8x32xf32>
    %312 = vector.extract_strided_slice %307 {offsets = [0, 96], sizes = [8, 32], strides = [1, 1]} : vector<8x128xf32> to vector<8x32xf32>
    %313 = arith.mulf %310, %273 : vector<8x32xf32>
    %314 = arith.mulf %309, %311 : vector<8x32xf32>
    %315 = arith.addf %313, %314 : vector<8x32xf32>
    %316 = math.tanh %315 : vector<8x32xf32>
    %317 = arith.mulf %312, %316 : vector<8x32xf32>
    %cst_81 = arith.constant dense<0.000000e+00> : vector<8x128xf32>
    %318 = tpu.matmul %317, %7, %cst_81 {dimension_numbers = #tpu.dot_dimension_numbers<[1], [0], [0], [1], [0, 0, 1, 1], [], []>} : vector<8x32xf32>, vector<32x128xf32>, vector<8x128xf32> -> vector<8x128xf32>
    %319 = arith.addf %298, %318 : vector<8x128xf32>
    %cst_82 = arith.constant 5.000000e-01 : f32
    %320 = vector.broadcast %cst_82 : f32 to vector<8x128xf32>
    %321 = arith.mulf %320, %319 : vector<8x128xf32>
    %322 = math.tanh %321 : vector<8x128xf32>
    %cst_83 = arith.constant 1.000000e+00 : f32
    %323 = vector.broadcast %cst_83 : f32 to vector<8x128xf32>
    %324 = arith.addf %323, %322 : vector<8x128xf32>
    %cst_84 = arith.constant 5.000000e-01 : f32
    %325 = vector.broadcast %cst_84 : f32 to vector<8x128xf32>
    %326 = arith.mulf %325, %324 : vector<8x128xf32>
    %327 = math.tanh %319 : vector<8x128xf32>
    %328 = vector.extract_strided_slice %326 {offsets = [0, 0], sizes = [8, 32], strides = [1, 1]} : vector<8x128xf32> to vector<8x32xf32>
    %329 = vector.extract_strided_slice %326 {offsets = [0, 32], sizes = [8, 32], strides = [1, 1]} : vector<8x128xf32> to vector<8x32xf32>
    %330 = vector.extract_strided_slice %327 {offsets = [0, 64], sizes = [8, 32], strides = [1, 1]} : vector<8x128xf32> to vector<8x32xf32>
    %331 = vector.extract_strided_slice %326 {offsets = [0, 96], sizes = [8, 32], strides = [1, 1]} : vector<8x128xf32> to vector<8x32xf32>
    %332 = arith.mulf %329, %292 : vector<8x32xf32>
    %333 = arith.mulf %328, %330 : vector<8x32xf32>
    %334 = arith.addf %332, %333 : vector<8x32xf32>
    %335 = math.tanh %334 : vector<8x32xf32>
    %336 = arith.mulf %331, %335 : vector<8x32xf32>
    %337 = vector.broadcast %10 : vector<1x32xf32> to vector<8x32xf32>
    %338 = arith.mulf %42, %337 : vector<8x32xf32>
    %cst_85 = arith.constant dense<0.000000e+00> : vector<8xf32>
    %339 = vector.multi_reduction <add>, %338, %cst_85 [1] : vector<8x32xf32> to vector<8xf32>
    %340 = vector.shape_cast %339 : vector<8xf32> to vector<8x1xf32>
    %341 = vector.broadcast %10 : vector<1x32xf32> to vector<8x32xf32>
    %342 = arith.mulf %84, %341 : vector<8x32xf32>
    %cst_86 = arith.constant dense<0.000000e+00> : vector<8xf32>
    %343 = vector.multi_reduction <add>, %342, %cst_86 [1] : vector<8x32xf32> to vector<8xf32>
    %344 = vector.shape_cast %343 : vector<8xf32> to vector<8x1xf32>
    %345 = vector.broadcast %10 : vector<1x32xf32> to vector<8x32xf32>
    %346 = arith.mulf %126, %345 : vector<8x32xf32>
    %cst_87 = arith.constant dense<0.000000e+00> : vector<8xf32>
    %347 = vector.multi_reduction <add>, %346, %cst_87 [1] : vector<8x32xf32> to vector<8xf32>
    %348 = vector.shape_cast %347 : vector<8xf32> to vector<8x1xf32>
    %349 = vector.broadcast %10 : vector<1x32xf32> to vector<8x32xf32>
    %350 = arith.mulf %168, %349 : vector<8x32xf32>
    %cst_88 = arith.constant dense<0.000000e+00> : vector<8xf32>
    %351 = vector.multi_reduction <add>, %350, %cst_88 [1] : vector<8x32xf32> to vector<8xf32>
    %352 = vector.shape_cast %351 : vector<8xf32> to vector<8x1xf32>
    %353 = vector.broadcast %10 : vector<1x32xf32> to vector<8x32xf32>
    %354 = arith.mulf %210, %353 : vector<8x32xf32>
    %cst_89 = arith.constant dense<0.000000e+00> : vector<8xf32>
    %355 = vector.multi_reduction <add>, %354, %cst_89 [1] : vector<8x32xf32> to vector<8xf32>
    %356 = vector.shape_cast %355 : vector<8xf32> to vector<8x1xf32>
    %357 = vector.broadcast %10 : vector<1x32xf32> to vector<8x32xf32>
    %358 = arith.mulf %252, %357 : vector<8x32xf32>
    %cst_90 = arith.constant dense<0.000000e+00> : vector<8xf32>
    %359 = vector.multi_reduction <add>, %358, %cst_90 [1] : vector<8x32xf32> to vector<8xf32>
    %360 = vector.shape_cast %359 : vector<8xf32> to vector<8x1xf32>
    %361 = vector.broadcast %10 : vector<1x32xf32> to vector<8x32xf32>
    %362 = arith.mulf %294, %361 : vector<8x32xf32>
    %cst_91 = arith.constant dense<0.000000e+00> : vector<8xf32>
    %363 = vector.multi_reduction <add>, %362, %cst_91 [1] : vector<8x32xf32> to vector<8xf32>
    %364 = vector.shape_cast %363 : vector<8xf32> to vector<8x1xf32>
    %365 = vector.broadcast %10 : vector<1x32xf32> to vector<8x32xf32>
    %366 = arith.mulf %336, %365 : vector<8x32xf32>
    %cst_92 = arith.constant dense<0.000000e+00> : vector<8xf32>
    %367 = vector.multi_reduction <add>, %366, %cst_92 [1] : vector<8x32xf32> to vector<8xf32>
    %368 = vector.shape_cast %367 : vector<8xf32> to vector<8x1xf32>
    %369 = arith.maximumf %340, %344 : vector<8x1xf32>
    %370 = arith.maximumf %369, %348 : vector<8x1xf32>
    %371 = arith.maximumf %370, %352 : vector<8x1xf32>
    %372 = arith.maximumf %371, %356 : vector<8x1xf32>
    %373 = arith.maximumf %372, %360 : vector<8x1xf32>
    %374 = arith.maximumf %373, %364 : vector<8x1xf32>
    %375 = arith.maximumf %374, %368 : vector<8x1xf32>
    %376 = arith.subf %340, %375 : vector<8x1xf32>
    %377 = math.exp %376 : vector<8x1xf32>
    %378 = arith.subf %344, %375 : vector<8x1xf32>
    %379 = math.exp %378 : vector<8x1xf32>
    %380 = arith.subf %348, %375 : vector<8x1xf32>
    %381 = math.exp %380 : vector<8x1xf32>
    %382 = arith.subf %352, %375 : vector<8x1xf32>
    %383 = math.exp %382 : vector<8x1xf32>
    %384 = arith.subf %356, %375 : vector<8x1xf32>
    %385 = math.exp %384 : vector<8x1xf32>
    %386 = arith.subf %360, %375 : vector<8x1xf32>
    %387 = math.exp %386 : vector<8x1xf32>
    %388 = arith.subf %364, %375 : vector<8x1xf32>
    %389 = math.exp %388 : vector<8x1xf32>
    %390 = arith.subf %368, %375 : vector<8x1xf32>
    %391 = math.exp %390 : vector<8x1xf32>
    %392 = vector.broadcast %377 : vector<8x1xf32> to vector<8x32xf32>
    %393 = arith.mulf %392, %42 : vector<8x32xf32>
    %394 = arith.addf %377, %379 : vector<8x1xf32>
    %395 = vector.broadcast %379 : vector<8x1xf32> to vector<8x32xf32>
    %396 = arith.mulf %395, %84 : vector<8x32xf32>
    %397 = arith.addf %393, %396 : vector<8x32xf32>
    %398 = arith.addf %394, %381 : vector<8x1xf32>
    %399 = vector.broadcast %381 : vector<8x1xf32> to vector<8x32xf32>
    %400 = arith.mulf %399, %126 : vector<8x32xf32>
    %401 = arith.addf %397, %400 : vector<8x32xf32>
    %402 = arith.addf %398, %383 : vector<8x1xf32>
    %403 = vector.broadcast %383 : vector<8x1xf32> to vector<8x32xf32>
    %404 = arith.mulf %403, %168 : vector<8x32xf32>
    %405 = arith.addf %401, %404 : vector<8x32xf32>
    %406 = arith.addf %402, %385 : vector<8x1xf32>
    %407 = vector.broadcast %385 : vector<8x1xf32> to vector<8x32xf32>
    %408 = arith.mulf %407, %210 : vector<8x32xf32>
    %409 = arith.addf %405, %408 : vector<8x32xf32>
    %410 = arith.addf %406, %387 : vector<8x1xf32>
    %411 = vector.broadcast %387 : vector<8x1xf32> to vector<8x32xf32>
    %412 = arith.mulf %411, %252 : vector<8x32xf32>
    %413 = arith.addf %409, %412 : vector<8x32xf32>
    %414 = arith.addf %410, %389 : vector<8x1xf32>
    %415 = vector.broadcast %389 : vector<8x1xf32> to vector<8x32xf32>
    %416 = arith.mulf %415, %294 : vector<8x32xf32>
    %417 = arith.addf %413, %416 : vector<8x32xf32>
    %418 = arith.addf %414, %391 : vector<8x1xf32>
    %419 = vector.broadcast %391 : vector<8x1xf32> to vector<8x32xf32>
    %420 = arith.mulf %419, %336 : vector<8x32xf32>
    %421 = arith.addf %417, %420 : vector<8x32xf32>
    %422 = vector.broadcast %418 : vector<8x1xf32> to vector<8x32xf32>
    %423 = arith.divf %421, %422 : vector<8x32xf32>
    %c0_93 = arith.constant 0 : index
    %c0_94 = arith.constant 0 : index
    %424 = vector.load %arg8[%c0_93, %c0_94] : memref<32x128xf32, #tpu.memory_space<vmem>>, vector<32x128xf32>
    %cst_95 = arith.constant dense<0.000000e+00> : vector<8x128xf32>
    %425 = tpu.matmul %423, %424, %cst_95 {dimension_numbers = #tpu.dot_dimension_numbers<[1], [0], [0], [1], [0, 0, 1, 1], [], []>} : vector<8x32xf32>, vector<32x128xf32>, vector<8x128xf32> -> vector<8x128xf32>
    %c0_96 = arith.constant 0 : index
    %c0_97 = arith.constant 0 : index
    %426 = vector.load %arg9[%c0_96, %c0_97] : memref<1x128xf32, #tpu.memory_space<vmem>>, vector<1x128xf32>
    %427 = vector.broadcast %426 : vector<1x128xf32> to vector<8x128xf32>
    %428 = arith.addf %425, %427 : vector<8x128xf32>
    %c0_98 = arith.constant 0 : index
    %c0_99 = arith.constant 0 : index
    %429 = vector.load %arg10[%c0_98, %c0_99] : memref<8x128xf32, #tpu.memory_space<vmem>>, vector<8x128xf32>
    tpu.vector_store %arg10[%c0_98, %c0_99], %428 {strides = array<i32>} : memref<8x128xf32, #tpu.memory_space<vmem>>, vector<8x128xf32>,
    return
  }
}

</mosaic_0001>

<llo_original>
// kernel: tpu_custom_call.1
$region0: #{tpu_custom_call.1}
  #allocation0 [shape = 'u32[]', space=smem, size = 0x4, offset = 0x4, fixed_abs, tag = 'smem constant byte address 0x4 - core index']
  #allocation1 [shape = 'u32[144,128]{1,0:T(1,128)}', space=vmem, size = 0x12000, scoped, tag = 'internal scratch']
  %s0 = inlined_call_operand.vmem [shape: f32[64,16], index: 0, kind: input, shape index: {}]
  %s1 = inlined_call_operand.hbm [shape: f32[16,128], index: 1, kind: input, shape index: {}]
  %s2 = inlined_call_operand.vmem [shape: f32[32,128], index: 2, kind: input, shape index: {}]
  %s3 = inlined_call_operand.vmem [shape: f32[1,128], index: 3, kind: input, shape index: {}]
  %s4 = inlined_call_operand.vmem [shape: f32[32,128], index: 4, kind: input, shape index: {}]
  %s5 = inlined_call_operand.vmem [shape: f32[32,128], index: 5, kind: input, shape index: {}]
  %s6 = inlined_call_operand.vmem [shape: f32[1,128], index: 6, kind: input, shape index: {}]
  %s7 = inlined_call_operand.vmem [shape: f32[1,32], index: 7, kind: input, shape index: {}]
  %s8 = inlined_call_operand.hbm [shape: f32[32,128], index: 8, kind: input, shape index: {}]
  %s9 = inlined_call_operand.vmem [shape: f32[1,128], index: 9, kind: input, shape index: {}]
  %s10 = inlined_call_operand.hbm [shape: f32[8,128], index: 10, kind: output, shape index: {}]
  %s11 = sld [smem:[#allocation0]]
  $region58: #{tpu_custom_call.1} parent=0
    _
  %s13 = ssub.s32 1, %s11
  %s14 = scalar_select 0, %s13, %s11
  $region1: #{tpu_custom_call.1} parent=0
    #allocation2 [shape = 'u8[8192]{0}', space=vmem, size = 0x2000, scoped, tag = 'input window, operand 1, single buffered']
    #allocation3 [shape = 's32[1]{0}', space=sflag, size = 0x4, scoped, tag = 'scoped memory for tpu_custom_call.1']
    #allocation4 [shape = 's32[1]{0}', space=sflag, size = 0x4, scoped, tag = 'scoped memory for tpu_custom_call.1']
    #allocation5 [shape = 'u8[16384]{0}', space=vmem, size = 0x4000, scoped, tag = 'input window, operand 8, single buffered']
    #allocation6 [shape = 's32[1]{0}', space=sflag, size = 0x4, scoped, tag = 'scoped memory for tpu_custom_call.1']
    #allocation7 [shape = 'u8[4096]{0}', space=vmem, size = 0x1000, scoped, tag = 'output window, operand 0, single buffered']
    %15 = vsyncpa [#allocation3], 0
    %16 = vsyncpa [#allocation6], 0
    %17 = vsyncpa [#allocation4], 0
    // Predicated region
    $region2: #{tpu_custom_call.1} parent=1 // pred_check
      _
    $region3: #{tpu_custom_call.1} parent=1 // pred_check_branch
      %19 = sbr.rel (0) target = $region5
    $region4: #{tpu_custom_call.1} parent=1 // pred_region
      _
    $region5: #{tpu_custom_call.1} parent=1 // pred_fallthru
      _
    // Predicated region
    $region6: #{tpu_custom_call.1} parent=1 // pred_check
      _
    $region7: #{tpu_custom_call.1} parent=1 // pred_check_branch
      %21 = sbr.rel (0) target = $region9
    $region8: #{tpu_custom_call.1} parent=1 // pred_region
      %s23 = ssub.s32 256, 256
      %24 = vsyncadd [#allocation3], %s23
      %s25 = sshll.u32 [#allocation2], 4
      %s26 = int_to_ptr.vmem [resolvable:$true] %s25
      %31 = dma.hbm_to_vmem [thread:$0]  %s1, 256, %s26, [#allocation3], 128, 128, 8
    $region9: #{tpu_custom_call.1} parent=1 // pred_fallthru
      _
    // Predicated region
    $region10: #{tpu_custom_call.1} parent=1 // pred_check
      _
    $region11: #{tpu_custom_call.1} parent=1 // pred_check_branch
      %33 = sbr.rel (0) target = $region13
    $region12: #{tpu_custom_call.1} parent=1 // pred_region
      _
    $region13: #{tpu_custom_call.1} parent=1 // pred_fallthru
      _
    // Predicated region
    $region14: #{tpu_custom_call.1} parent=1 // pred_check
      _
    $region15: #{tpu_custom_call.1} parent=1 // pred_check_branch
      %35 = sbr.rel (0) target = $region17
    $region16: #{tpu_custom_call.1} parent=1 // pred_region
      _
    $region17: #{tpu_custom_call.1} parent=1 // pred_fallthru
      _
    // Predicated region
    $region18: #{tpu_custom_call.1} parent=1 // pred_check
      _
    $region19: #{tpu_custom_call.1} parent=1 // pred_check_branch
      %37 = sbr.rel (0) target = $region21
    $region20: #{tpu_custom_call.1} parent=1 // pred_region
      _
    $region21: #{tpu_custom_call.1} parent=1 // pred_fallthru
      _
    // Predicated region
    $region22: #{tpu_custom_call.1} parent=1 // pred_check
      _
    $region23: #{tpu_custom_call.1} parent=1 // pred_check_branch
      %39 = sbr.rel (0) target = $region25
    $region24: #{tpu_custom_call.1} parent=1 // pred_region
      _
    $region25: #{tpu_custom_call.1} parent=1 // pred_fallthru
      _
    // Predicated region
    $region26: #{tpu_custom_call.1} parent=1 // pred_check
      _
    $region27: #{tpu_custom_call.1} parent=1 // pred_check_branch
      %41 = sbr.rel (0) target = $region29
    $region28: #{tpu_custom_call.1} parent=1 // pred_region
      _
    $region29: #{tpu_custom_call.1} parent=1 // pred_fallthru
      _
    // Predicated region
    $region30: #{tpu_custom_call.1} parent=1 // pred_check
      _
    $region31: #{tpu_custom_call.1} parent=1 // pred_check_branch
      %43 = sbr.rel (0) target = $region33
    $region32: #{tpu_custom_call.1} parent=1 // pred_region
      _
    $region33: #{tpu_custom_call.1} parent=1 // pred_fallthru
      _
    // Predicated region
    $region34: #{tpu_custom_call.1} parent=1 // pred_check
      _
    $region35: #{tpu_custom_call.1} parent=1 // pred_check_branch
      %45 = sbr.rel (0) target = $region37
    $region36: #{tpu_custom_call.1} parent=1 // pred_region
      %s47 = ssub.s32 512, 512
      %48 = vsyncadd [#allocation6], %s47
      %s49 = sshll.u32 [#allocation5], 4
      %s50 = int_to_ptr.vmem [resolvable:$true] %s49
      %55 = dma.hbm_to_vmem [thread:$0]  %s8, 512, %s50, [#allocation6], 128, 128, 8
    $region37: #{tpu_custom_call.1} parent=1 // pred_fallthru
      _
    // Predicated region
    $region38: #{tpu_custom_call.1} parent=1 // pred_check
      _
    $region39: #{tpu_custom_call.1} parent=1 // pred_check_branch
      %57 = sbr.rel (0) target = $region41
    $region40: #{tpu_custom_call.1} parent=1 // pred_region
      _
    $region41: #{tpu_custom_call.1} parent=1 // pred_fallthru
      _
    // Predicated region
    $region42: #{tpu_custom_call.1} parent=1 // pred_check
      _
    $region43: #{tpu_custom_call.1} parent=1 // pred_check_branch
      %59 = sbr.rel (0) target = $region45
    $region44: #{tpu_custom_call.1} parent=1 // pred_region
      %60 = dma.done [#allocation3], 256
    $region45: #{tpu_custom_call.1} parent=1 // pred_fallthru
      _
    // Predicated region
    $region46: #{tpu_custom_call.1} parent=1 // pred_check
      _
    $region47: #{tpu_custom_call.1} parent=1 // pred_check_branch
      %62 = sbr.rel (0) target = $region49
    $region48: #{tpu_custom_call.1} parent=1 // pred_region
      %63 = dma.done [#allocation6], 512
    $region49: #{tpu_custom_call.1} parent=1 // pred_fallthru
      _
    %v64 = vld [vmem:[%s0] sm:$0xff]
    %v65 = vld [vmem:[%s0 + $0x8] sm:$0xff]
    %v66 = vld [vmem:[%s0 + $0x10] sm:$0xff]
    %v67 = vld [vmem:[%s0 + $0x18] sm:$0xff]
    %v68 = vld [vmem:[%s0 + $0x20] sm:$0xff]
    %v69 = vld [vmem:[%s0 + $0x28] sm:$0xff]
    %v70 = vld [vmem:[%s0 + $0x30] sm:$0xff]
    %v71 = vld [vmem:[%s0 + $0x38] sm:$0xff]
    %v72 = vld [vmem:[#allocation2] sm:$0xff]
    %v73 = vld [vmem:[#allocation2 + $0x8] sm:$0xff]
    %v74 = vld [vmem:[%s3] sm:$0x1]
    %v76 = vlaneseq
    %v77 = vshrl.u32 %v76, 7
    %v78 = vsub.s32 0, %v77
    %v79 = vrot.slane %v74, %v78
    %vm81 = vcmask 130048
    %v83 = vsel %vm81, %v64, 0
    %v86 = vsel %vm81, %v65, 0
    %v89 = vsel %vm81, %v66, 0
    %v92 = vsel %vm81, %v67, 0
    %v95 = vsel %vm81, %v68, 0
    %v98 = vsel %vm81, %v69, 0
    %v101 = vsel %vm81, %v70, 0
    %v104 = vsel %vm81, %v71, 0
    %106 = vmatprep.subr.mxu0 0.0
    %107 = vmatpush1.msra.mxu0 %v72
    %108 = vmatprep.subr.mxu0 0.0
    %109 = vmatpush1.msra.mxu0 %v73
    %110 = vmatprep.subr.mxu0 0.0
    %111 = vmatpush1.msra.mxu0 0.0
    %112 = vmatprep.subr.mxu0 0.0
    %113 = vmatpush1.msra.mxu0 0.0
    %114 = vmatprep.subr.mxu0 0.0
    %115 = vmatpush1.msra.mxu0 0.0
    %116 = vmatprep.subr.mxu0 0.0
    %117 = vmatpush1.msra.mxu0 0.0
    %118 = vmatprep.subr.mxu0 0.0
    %119 = vmatpush1.msra.mxu0 0.0
    %120 = vmatprep.subr.mxu0 0.0
    %121 = vmatpush1.msra.mxu0 0.0
    %122 = vmatprep.subr.mxu0 0.0
    %123 = vmatpush1.msra.mxu0 0.0
    %124 = vmatprep.subr.mxu0 0.0
    %125 = vmatpush1.msra.mxu0 0.0
    %126 = vmatprep.subr.mxu0 0.0
    %127 = vmatpush1.msra.mxu0 0.0
    %128 = vmatprep.subr.mxu0 0.0
    %129 = vmatpush1.msra.mxu0 0.0
    %130 = vmatprep.subr.mxu0 0.0
    %131 = vmatpush1.msra.mxu0 0.0
    %132 = vmatprep.subr.mxu0 0.0
    %133 = vmatpush1.msra.mxu0 0.0
    %134 = vmatprep.subr.mxu0 0.0
    %135 = vmatpush1.msra.mxu0 0.0
    %136 = vmatprep.subr.mxu0 0.0
    %137 = vmatpush1.msra.mxu0 0.0
    %138 = vmatprep.subr.mxu0 0.0
    %139 = vmatpush1.msra.mxu0 0.0
    %140 = vmatprep.subr.mxu0 0.0
    %141 = vmatpush1.msra.mxu0 0.0
    %142 = vmatprep.subr.mxu0 0.0
    %143 = vmatpush1.msra.mxu0 0.0
    %144 = vmatprep.subr.mxu0 0.0
    %145 = vmatpush1.msra.mxu0 0.0
    %146 = vmatprep.subr.mxu0 0.0
    %147 = vmatpush1.msra.mxu0 0.0
    %148 = vmatprep.subr.mxu0 0.0
    %149 = vmatpush1.msra.mxu0 0.0
    %150 = vmatprep.subr.mxu0 0.0
    %151 = vmatpush1.msra.mxu0 0.0
    %152 = vmatprep.subr.mxu0 0.0
    %153 = vmatpush1.msra.mxu0 0.0
    %154 = vmatprep.subr.mxu0 0.0
    %155 = vmatpush1.msra.mxu0 0.0
    %156 = vmatprep.subr.mxu0 0.0
    %157 = vmatpush1.msra.mxu0 0.0
    %158 = vmatprep.subr.mxu0 0.0
    %159 = vmatpush1.msra.mxu0 0.0
    %160 = vmatprep.subr.mxu0 0.0
    %161 = vmatpush1.msra.mxu0 0.0
    %162 = vmatprep.subr.mxu0 0.0
    %163 = vmatpush1.msra.mxu0 0.0
    %164 = vmatprep.subr.mxu0 0.0
    %165 = vmatpush1.msra.mxu0 0.0
    %166 = vmatprep.subr.mxu0 0.0
    %167 = vmatpush1.msra.mxu0 0.0
    %168 = vmatprep.subr.mxu0 0.0
    %169 = vmatpush1.msra.mxu0 0.0
    %170 = vmatprep.mubr.f32.mxu0 0.0
    %171 = vmatmul.mubr.f32.gmra.mrb[0].mxu0 %v83
    %v172 = vpop.f32.mrb[0].mxu0
    %v173 = vadd.f32 %v79, %v172
    %v174 = vpop.f32.mrb[0].mxu0
    %175 = vmatprep.mubr.f32.mxu0 0.0
    %176 = vmatmul.mubr.f32.gmra.mrb[0].mxu0 %v86
    %v177 = vpop.f32.mrb[0].mxu0
    %v178 = vadd.f32 %v79, %v177
    %v179 = vpop.f32.mrb[0].mxu0
    %180 = vmatprep.mubr.f32.mxu0 0.0
    %181 = vmatmul.mubr.f32.gmra.mrb[0].mxu0 %v89
    %v182 = vpop.f32.mrb[0].mxu0
    %v183 = vadd.f32 %v79, %v182
    %v184 = vpop.f32.mrb[0].mxu0
    %185 = vmatprep.mubr.f32.mxu0 0.0
    %186 = vmatmul.mubr.f32.gmra.mrb[0].mxu0 %v92
    %v187 = vpop.f32.mrb[0].mxu0
    %v188 = vadd.f32 %v79, %v187
    %v189 = vpop.f32.mrb[0].mxu0
    %190 = vmatprep.mubr.f32.mxu0 0.0
    %191 = vmatmul.mubr.f32.gmra.mrb[0].mxu0 %v95
    %v192 = vpop.f32.mrb[0].mxu0
    %v193 = vadd.f32 %v79, %v192
    %v194 = vpop.f32.mrb[0].mxu0
    %195 = vmatprep.mubr.f32.mxu0 0.0
    %196 = vmatmul.mubr.f32.gmra.mrb[0].mxu0 %v98
    %v197 = vpop.f32.mrb[0].mxu0
    %v198 = vadd.f32 %v79, %v197
    %v199 = vpop.f32.mrb[0].mxu0
    %200 = vmatprep.mubr.f32.mxu0 0.0
    %201 = vmatmul.mubr.f32.gmra.mrb[0].mxu0 %v101
    %v202 = vpop.f32.mrb[0].mxu0
    %v203 = vadd.f32 %v79, %v202
    %v204 = vpop.f32.mrb[0].mxu0
    %205 = vmatprep.mubr.f32.mxu0 0.0
    %206 = vmatmul.mubr.f32.gmra.mrb[0].mxu0 %v104
    %v207 = vpop.f32.mrb[0].mxu0
    %v208 = vadd.f32 %v79, %v207
    %v209 = vpop.f32.mrb[0].mxu0
    %210 = vdwg.mxu0
    %v211 = vld [vmem:[%s2] sm:$0xff]
    %v212 = vld [vmem:[%s2 + $0x8] sm:$0xff]
    %v213 = vld [vmem:[%s2 + $0x10] sm:$0xff]
    %v214 = vld [vmem:[%s2 + $0x18] sm:$0xff]
    %v215 = vld [vmem:[%s4] sm:$0xff]
    %v216 = vld [vmem:[%s4 + $0x8] sm:$0xff]
    %v217 = vld [vmem:[%s4 + $0x10] sm:$0xff]
    %v218 = vld [vmem:[%s4 + $0x18] sm:$0xff]
    %v219 = vld [vmem:[%s5] sm:$0xff]
    %v220 = vld [vmem:[%s5 + $0x8] sm:$0xff]
    %v221 = vld [vmem:[%s5 + $0x10] sm:$0xff]
    %v222 = vld [vmem:[%s5 + $0x18] sm:$0xff]
    %v223 = vld [vmem:[%s6] sm:$0x1]
    %v224 = vld [vmem:[%s7] sm:$0x1]
    %v225 = vmul.f32 %v173, 0.5
    %v226 = vtanh.pop %v225
    %v227 = vadd.f32 %v226, 1.0
    %v228 = vmul.f32 %v227, 0.5
    %v229 = vtanh.pop %v173
    %231 = vrot.lane.b32.xlu0 %v229, 64
    %v232 = vpop.permute.xlu0 %231
    %v234 = vmul.f32 %v228, %v232
    %v235 = vtanh.pop %v234
    %237 = vrot.lane.b32.xlu0 %v235, 96
    %v238 = vpop.permute.xlu0 %237
    %v240 = vmul.f32 %v228, %v238
    %242 = vrot.lane.b32.xlu0 %v240, 32
    %v243 = vpop.permute.xlu0 %242
    %vm244 = vcmask 261120
    %v245 = vsel %vm244, %v243, 0
    %247 = vmatprep.subr.mxu0 0.0
    %248 = vmatpush1.msra.mxu0 %v215
    %249 = vmatprep.subr.mxu0 0.0
    %250 = vmatpush1.msra.mxu0 %v216
    %251 = vmatprep.subr.mxu0 0.0
    %252 = vmatpush1.msra.mxu0 %v217
    %253 = vmatprep.subr.mxu0 0.0
    %254 = vmatpush1.msra.mxu0 %v218
    %255 = vmatprep.subr.mxu0 0.0
    %256 = vmatpush1.msra.mxu0 0.0
    %257 = vmatprep.subr.mxu0 0.0
    %258 = vmatpush1.msra.mxu0 0.0
    %259 = vmatprep.subr.mxu0 0.0
    %260 = vmatpush1.msra.mxu0 0.0
    %261 = vmatprep.subr.mxu0 0.0
    %262 = vmatpush1.msra.mxu0 0.0
    %263 = vmatprep.subr.mxu0 0.0
    %264 = vmatpush1.msra.mxu0 0.0
    %265 = vmatprep.subr.mxu0 0.0
    %266 = vmatpush1.msra.mxu0 0.0
    %267 = vmatprep.subr.mxu0 0.0
    %268 = vmatpush1.msra.mxu0 0.0
    %269 = vmatprep.subr.mxu0 0.0
    %270 = vmatpush1.msra.mxu0 0.0
    %271 = vmatprep.subr.mxu0 0.0
    %272 = vmatpush1.msra.mxu0 0.0
    %273 = vmatprep.subr.mxu0 0.0
    %274 = vmatpush1.msra.mxu0 0.0
    %275 = vmatprep.subr.mxu0 0.0
    %276 = vmatpush1.msra.mxu0 0.0
    %277 = vmatprep.subr.mxu0 0.0
    %278 = vmatpush1.msra.mxu0 0.0
    %279 = vmatprep.subr.mxu0 0.0
    %280 = vmatpush1.msra.mxu0 0.0
    %281 = vmatprep.subr.mxu0 0.0
    %282 = vmatpush1.msra.mxu0 0.0
    %283 = vmatprep.subr.mxu0 0.0
    %284 = vmatpush1.msra.mxu0 0.0
    %285 = vmatprep.subr.mxu0 0.0
    %286 = vmatpush1.msra.mxu0 0.0
    %287 = vmatprep.subr.mxu0 0.0
    %288 = vmatpush1.msra.mxu0 0.0
    %289 = vmatprep.subr.mxu0 0.0
    %290 = vmatpush1.msra.mxu0 0.0
    %291 = vmatprep.subr.mxu0 0.0
    %292 = vmatpush1.msra.mxu0 0.0
    %293 = vmatprep.subr.mxu0 0.0
    %294 = vmatpush1.msra.mxu0 0.0
    %295 = vmatprep.subr.mxu0 0.0
    %296 = vmatpush1.msra.mxu0 0.0
    %297 = vmatprep.subr.mxu0 0.0
    %298 = vmatpush1.msra.mxu0 0.0
    %299 = vmatprep.subr.mxu0 0.0
    %300 = vmatpush1.msra.mxu0 0.0
    %301 = vmatprep.subr.mxu0 0.0
    %302 = vmatpush1.msra.mxu0 0.0
    %303 = vmatprep.subr.mxu0 0.0
    %304 = vmatpush1.msra.mxu0 0.0
    %305 = vmatprep.subr.mxu0 0.0
    %306 = vmatpush1.msra.mxu0 0.0
    %307 = vmatprep.subr.mxu0 0.0
    %308 = vmatpush1.msra.mxu0 0.0
    %309 = vmatprep.subr.mxu0 0.0
    %310 = vmatpush1.msra.mxu0 0.0
    %311 = vmatprep.mubr.f32.mxu0 0.0
    %312 = vmatmul.mubr.f32.gmra.mrb[0].mxu0 %v245
    %v313 = vpop.f32.mrb[0].mxu0
    %v314 = vadd.f32 0.0, %v313
    %v315 = vpop.f32.mrb[0].mxu0
    %316 = vdwg.mxu0
    %v318 = vlaneseq
    %v319 = vshrl.u32 %v318, 7
    %v320 = vsub.s32 0, %v319
    %v321 = vrot.slane %v223, %v320
    %v323 = vadd.f32 %v321, %v314
    %v324 = vmul.f32 %v323, 0.5
    %v325 = vtanh.pop %v324
    %v326 = vadd.f32 %v325, 1.0
    %v327 = vmul.f32 %v326, 0.5
    %v328 = vtanh.pop %v323
    %330 = vrot.lane.b32.xlu0 %v328, 64
    %v331 = vpop.permute.xlu0 %330
    %v333 = vmul.f32 %v327, %v331
    %v334 = vtanh.pop %v333
    %336 = vrot.lane.b32.xlu0 %v334, 96
    %v337 = vpop.permute.xlu0 %336
    %v339 = vmul.f32 %v327, %v337
    %340 = vmatprep.subr.mxu0 0.0
    %341 = vmatpush1.msra.mxu0 %v211
    %342 = vmatprep.subr.mxu0 0.0
    %343 = vmatpush1.msra.mxu0 %v212
    %344 = vmatprep.subr.mxu0 0.0
    %345 = vmatpush1.msra.mxu0 %v213
    %346 = vmatprep.subr.mxu0 0.0
    %347 = vmatpush1.msra.mxu0 %v214
    %348 = vmatprep.subr.mxu0 0.0
    %349 = vmatpush1.msra.mxu0 0.0
    %350 = vmatprep.subr.mxu0 0.0
    %351 = vmatpush1.msra.mxu0 0.0
    %352 = vmatprep.subr.mxu0 0.0
    %353 = vmatpush1.msra.mxu0 0.0
    %354 = vmatprep.subr.mxu0 0.0
    %355 = vmatpush1.msra.mxu0 0.0
    %356 = vmatprep.subr.mxu0 0.0
    %357 = vmatpush1.msra.mxu0 0.0
    %358 = vmatprep.subr.mxu0 0.0
    %359 = vmatpush1.msra.mxu0 0.0
    %360 = vmatprep.subr.mxu0 0.0
    %361 = vmatpush1.msra.mxu0 0.0
    %362 = vmatprep.subr.mxu0 0.0
    %363 = vmatpush1.msra.mxu0 0.0
    %364 = vmatprep.subr.mxu0 0.0
    %365 = vmatpush1.msra.mxu0 0.0
    %366 = vmatprep.subr.mxu0 0.0
    %367 = vmatpush1.msra.mxu0 0.0
    %368 = vmatprep.subr.mxu0 0.0
    %369 = vmatpush1.msra.mxu0 0.0
    %370 = vmatprep.subr.mxu0 0.0
    %371 = vmatpush1.msra.mxu0 0.0
    %372 = vmatprep.subr.mxu0 0.0
    %373 = vmatpush1.msra.mxu0 0.0
    %374 = vmatprep.subr.mxu0 0.0
    %375 = vmatpush1.msra.mxu0 0.0
    %376 = vmatprep.subr.mxu0 0.0
    %377 = vmatpush1.msra.mxu0 0.0
    %378 = vmatprep.subr.mxu0 0.0
    %379 = vmatpush1.msra.mxu0 0.0
    %380 = vmatprep.subr.mxu0 0.0
    %381 = vmatpush1.msra.mxu0 0.0
    %382 = vmatprep.subr.mxu0 0.0
    %383 = vmatpush1.msra.mxu0 0.0
    %384 = vmatprep.subr.mxu0 0.0
    %385 = vmatpush1.msra.mxu0 0.0
    %386 = vmatprep.subr.mxu0 0.0
    %387 = vmatpush1.msra.mxu0 0.0
    %388 = vmatprep.subr.mxu0 0.0
    %389 = vmatpush1.msra.mxu0 0.0
    %390 = vmatprep.subr.mxu0 0.0
    %391 = vmatpush1.msra.mxu0 0.0
    %392 = vmatprep.subr.mxu0 0.0
    %393 = vmatpush1.msra.mxu0 0.0
    %394 = vmatprep.subr.mxu0 0.0
    %395 = vmatpush1.msra.mxu0 0.0
    %396 = vmatprep.subr.mxu0 0.0
    %397 = vmatpush1.msra.mxu0 0.0
    %398 = vmatprep.subr.mxu0 0.0
    %399 = vmatpush1.msra.mxu0 0.0
    %400 = vmatprep.subr.mxu0 0.0
    %401 = vmatpush1.msra.mxu0 0.0
    %402 = vmatprep.subr.mxu0 0.0
    %403 = vmatpush1.msra.mxu0 0.0
    %404 = vmatprep.mubr.f32.mxu0 0.0
    %405 = vmatmul.mubr.f32.gmra.mrb[0].mxu0 %v245
    %v406 = vpop.f32.mrb[0].mxu0
    %v407 = vadd.f32 0.0, %v406
    %v408 = vpop.f32.mrb[0].mxu0
    %409 = vdwg.mxu0
    %411 = vrot.lane.b32.xlu0 %v339, 32
    %v412 = vpop.permute.xlu0 %411
    %v413 = vsel %vm244, %v412, 0
    %415 = vmatprep.subr.mxu0 0.0
    %416 = vmatpush1.msra.mxu0 %v219
    %417 = vmatprep.subr.mxu0 0.0
    %418 = vmatpush1.msra.mxu0 %v220
    %419 = vmatprep.subr.mxu0 0.0
    %420 = vmatpush1.msra.mxu0 %v221
    %421 = vmatprep.subr.mxu0 0.0
    %422 = vmatpush1.msra.mxu0 %v222
    %423 = vmatprep.subr.mxu0 0.0
    %424 = vmatpush1.msra.mxu0 0.0
    %425 = vmatprep.subr.mxu0 0.0
    %426 = vmatpush1.msra.mxu0 0.0
    %427 = vmatprep.subr.mxu0 0.0
    %428 = vmatpush1.msra.mxu0 0.0
    %429 = vmatprep.subr.mxu0 0.0
    %430 = vmatpush1.msra.mxu0 0.0
    %431 = vmatprep.subr.mxu0 0.0
    %432 = vmatpush1.msra.mxu0 0.0
    %433 = vmatprep.subr.mxu0 0.0
    %434 = vmatpush1.msra.mxu0 0.0
    %435 = vmatprep.subr.mxu0 0.0
    %436 = vmatpush1.msra.mxu0 0.0
    %437 = vmatprep.subr.mxu0 0.0
    %438 = vmatpush1.msra.mxu0 0.0
    %439 = vmatprep.subr.mxu0 0.0
    %440 = vmatpush1.msra.mxu0 0.0
    %441 = vmatprep.subr.mxu0 0.0
    %442 = vmatpush1.msra.mxu0 0.0
    %443 = vmatprep.subr.mxu0 0.0
    %444 = vmatpush1.msra.mxu0 0.0
    %445 = vmatprep.subr.mxu0 0.0
    %446 = vmatpush1.msra.mxu0 0.0
    %447 = vmatprep.subr.mxu0 0.0
    %448 = vmatpush1.msra.mxu0 0.0
    %449 = vmatprep.subr.mxu0 0.0
    %450 = vmatpush1.msra.mxu0 0.0
    %451 = vmatprep.subr.mxu0 0.0
    %452 = vmatpush1.msra.mxu0 0.0
    %453 = vmatprep.subr.mxu0 0.0
    %454 = vmatpush1.msra.mxu0 0.0
    %455 = vmatprep.subr.mxu0 0.0
    %456 = vmatpush1.msra.mxu0 0.0
    %457 = vmatprep.subr.mxu0 0.0
    %458 = vmatpush1.msra.mxu0 0.0
    %459 = vmatprep.subr.mxu0 0.0
    %460 = vmatpush1.msra.mxu0 0.0
    %461 = vmatprep.subr.mxu0 0.0
    %462 = vmatpush1.msra.mxu0 0.0
    %463 = vmatprep.subr.mxu0 0.0
    %464 = vmatpush1.msra.mxu0 0.0
    %465 = vmatprep.subr.mxu0 0.0
    %466 = vmatpush1.msra.mxu0 0.0
    %467 = vmatprep.subr.mxu0 0.0
    %468 = vmatpush1.msra.mxu0 0.0
    %469 = vmatprep.subr.mxu0 0.0
    %470 = vmatpush1.msra.mxu0 0.0
    %471 = vmatprep.subr.mxu0 0.0
    %472 = vmatpush1.msra.mxu0 0.0
    %473 = vmatprep.subr.mxu0 0.0
    %474 = vmatpush1.msra.mxu0 0.0
    %475 = vmatprep.subr.mxu0 0.0
    %476 = vmatpush1.msra.mxu0 0.0
    %477 = vmatprep.subr.mxu0 0.0
    %478 = vmatpush1.msra.mxu0 0.0
    %479 = vmatprep.mubr.f32.mxu0 0.0
    %480 = vmatmul.mubr.f32.gmra.mrb[0].mxu0 %v413
    %v481 = vpop.f32.mrb[0].mxu0
    %v482 = vadd.f32 0.0, %v481
    %v483 = vpop.f32.mrb[0].mxu0
    %484 = vdwg.mxu0
    %v485 = vadd.f32 %v321, %v482
    %v486 = vadd.f32 %v178, %v407
    %v487 = vmul.f32 %v486, 0.5
    %v488 = vtanh.pop %v487
    %v489 = vadd.f32 %v488, 1.0
    %v490 = vmul.f32 %v489, 0.5
    %v491 = vtanh.pop %v486
    %493 = vrot.lane.b32.xlu0 %v234, 32
    %v494 = vpop.permute.xlu0 %493
    %v496 = vmul.f32 %v490, %v494
    %498 = vrot.lane.b32.xlu0 %v491, 64
    %v499 = vpop.permute.xlu0 %498
    %v501 = vmul.f32 %v490, %v499
    %503 = vrot.lane.b32.xlu0 %v501, 32
    %v504 = vpop.permute.xlu0 %503
    %v506 = vadd.f32 %v496, %v504
    %v507 = vtanh.pop %v506
    %509 = vrot.lane.b32.xlu0 %v507, 64
    %v510 = vpop.permute.xlu0 %509
    %v512 = vmul.f32 %v490, %v510
    %514 = vrot.lane.b32.xlu0 %v512, 32
    %v515 = vpop.permute.xlu0 %514
    %v516 = vsel %vm244, %v515, 0
    %518 = vmatprep.subr.mxu0 0.0
    %519 = vmatpush1.msra.mxu0 %v215
    %520 = vmatprep.subr.mxu0 0.0
    %521 = vmatpush1.msra.mxu0 %v216
    %522 = vmatprep.subr.mxu0 0.0
    %523 = vmatpush1.msra.mxu0 %v217
    %524 = vmatprep.subr.mxu0 0.0
    %525 = vmatpush1.msra.mxu0 %v218
    %526 = vmatprep.subr.mxu0 0.0
    %527 = vmatpush1.msra.mxu0 0.0
    %528 = vmatprep.subr.mxu0 0.0
    %529 = vmatpush1.msra.mxu0 0.0
    %530 = vmatprep.subr.mxu0 0.0
    %531 = vmatpush1.msra.mxu0 0.0
    %532 = vmatprep.subr.mxu0 0.0
    %533 = vmatpush1.msra.mxu0 0.0
    %534 = vmatprep.subr.mxu0 0.0
    %535 = vmatpush1.msra.mxu0 0.0
    %536 = vmatprep.subr.mxu0 0.0
    %537 = vmatpush1.msra.mxu0 0.0
    %538 = vmatprep.subr.mxu0 0.0
    %539 = vmatpush1.msra.mxu0 0.0
    %540 = vmatprep.subr.mxu0 0.0
    %541 = vmatpush1.msra.mxu0 0.0
    %542 = vmatprep.subr.mxu0 0.0
    %543 = vmatpush1.msra.mxu0 0.0
    %544 = vmatprep.subr.mxu0 0.0
    %545 = vmatpush1.msra.mxu0 0.0
    %546 = vmatprep.subr.mxu0 0.0
    %547 = vmatpush1.msra.mxu0 0.0
    %548 = vmatprep.subr.mxu0 0.0
    %549 = vmatpush1.msra.mxu0 0.0
    %550 = vmatprep.subr.mxu0 0.0
    %551 = vmatpush1.msra.mxu0 0.0
    %552 = vmatprep.subr.mxu0 0.0
    %553 = vmatpush1.msra.mxu0 0.0
    %554 = vmatprep.subr.mxu0 0.0
    %555 = vmatpush1.msra.mxu0 0.0
    %556 = vmatprep.subr.mxu0 0.0
    %557 = vmatpush1.msra.mxu0 0.0
    %558 = vmatprep.subr.mxu0 0.0
    %559 = vmatpush1.msra.mxu0 0.0
    %560 = vmatprep.subr.mxu0 0.0
    %561 = vmatpush1.msra.mxu0 0.0
    %562 = vmatprep.subr.mxu0 0.0
    %563 = vmatpush1.msra.mxu0 0.0
    %564 = vmatprep.subr.mxu0 0.0
    %565 = vmatpush1.msra.mxu0 0.0
    %566 = vmatprep.subr.mxu0 0.0
    %567 = vmatpush1.msra.mxu0 0.0
    %568 = vmatprep.subr.mxu0 0.0
    %569 = vmatpush1.msra.mxu0 0.0
    %570 = vmatprep.subr.mxu0 0.0
    %571 = vmatpush1.msra.mxu0 0.0
    %572 = vmatprep.subr.mxu0 0.0
    %573 = vmatpush1.msra.mxu0 0.0
    %574 = vmatprep.subr.mxu0 0.0
    %575 = vmatpush1.msra.mxu0 0.0
    %576 = vmatprep.subr.mxu0 0.0
    %577 = vmatpush1.msra.mxu0 0.0
    %578 = vmatprep.subr.mxu0 0.0
    %579 = vmatpush1.msra.mxu0 0.0
    %580 = vmatprep.subr.mxu0 0.0
    %581 = vmatpush1.msra.mxu0 0.0
    %582 = vmatprep.mubr.f32.mxu0 0.0
    %583 = vmatmul.mubr.f32.gmra.mrb[0].mxu0 %v516
    %v584 = vpop.f32.mrb[0].mxu0
    %v585 = vadd.f32 0.0, %v584
    %v586 = vpop.f32.mrb[0].mxu0
    %587 = vdwg.mxu0
    %v588 = vadd.f32 %v485, %v585
    %v589 = vmul.f32 %v588, 0.5
    %v590 = vtanh.pop %v589
    %v591 = vadd.f32 %v590, 1.0
    %v592 = vmul.f32 %v591, 0.5
    %v593 = vtanh.pop %v588
    %595 = vrot.lane.b32.xlu0 %v333, 32
    %v596 = vpop.permute.xlu0 %595
    %v598 = vmul.f32 %v592, %v596
    %600 = vrot.lane.b32.xlu0 %v593, 64
    %v601 = vpop.permute.xlu0 %600
    %v603 = vmul.f32 %v592, %v601
    %605 = vrot.lane.b32.xlu0 %v603, 32
    %v606 = vpop.permute.xlu0 %605
    %v608 = vadd.f32 %v598, %v606
    %v609 = vtanh.pop %v608
    %611 = vrot.lane.b32.xlu0 %v609, 64
    %v612 = vpop.permute.xlu0 %611
    %v614 = vmul.f32 %v592, %v612
    %615 = vmatprep.subr.mxu0 0.0
    %616 = vmatpush1.msra.mxu0 %v211
    %617 = vmatprep.subr.mxu0 0.0
    %618 = vmatpush1.msra.mxu0 %v212
    %619 = vmatprep.subr.mxu0 0.0
    %620 = vmatpush1.msra.mxu0 %v213
    %621 = vmatprep.subr.mxu0 0.0
    %622 = vmatpush1.msra.mxu0 %v214
    %623 = vmatprep.subr.mxu0 0.0
    %624 = vmatpush1.msra.mxu0 0.0
    %625 = vmatprep.subr.mxu0 0.0
    %626 = vmatpush1.msra.mxu0 0.0
    %627 = vmatprep.subr.mxu0 0.0
    %628 = vmatpush1.msra.mxu0 0.0
    %629 = vmatprep.subr.mxu0 0.0
    %630 = vmatpush1.msra.mxu0 0.0
    %631 = vmatprep.subr.mxu0 0.0
    %632 = vmatpush1.msra.mxu0 0.0
    %633 = vmatprep.subr.mxu0 0.0
    %634 = vmatpush1.msra.mxu0 0.0
    %635 = vmatprep.subr.mxu0 0.0
    %636 = vmatpush1.msra.mxu0 0.0
    %637 = vmatprep.subr.mxu0 0.0
    %638 = vmatpush1.msra.mxu0 0.0
    %639 = vmatprep.subr.mxu0 0.0
    %640 = vmatpush1.msra.mxu0 0.0
    %641 = vmatprep.subr.mxu0 0.0
    %642 = vmatpush1.msra.mxu0 0.0
    %643 = vmatprep.subr.mxu0 0.0
    %644 = vmatpush1.msra.mxu0 0.0
    %645 = vmatprep.subr.mxu0 0.0
    %646 = vmatpush1.msra.mxu0 0.0
    %647 = vmatprep.subr.mxu0 0.0
    %648 = vmatpush1.msra.mxu0 0.0
    %649 = vmatprep.subr.mxu0 0.0
    %650 = vmatpush1.msra.mxu0 0.0
    %651 = vmatprep.subr.mxu0 0.0
    %652 = vmatpush1.msra.mxu0 0.0
    %653 = vmatprep.subr.mxu0 0.0
    %654 = vmatpush1.msra.mxu0 0.0
    %655 = vmatprep.subr.mxu0 0.0
    %656 = vmatpush1.msra.mxu0 0.0
    %657 = vmatprep.subr.mxu0 0.0
    %658 = vmatpush1.msra.mxu0 0.0
    %659 = vmatprep.subr.mxu0 0.0
    %660 = vmatpush1.msra.mxu0 0.0
    %661 = vmatprep.subr.mxu0 0.0
    %662 = vmatpush1.msra.mxu0 0.0
    %663 = vmatprep.subr.mxu0 0.0
    %664 = vmatpush1.msra.mxu0 0.0
    %665 = vmatprep.subr.mxu0 0.0
    %666 = vmatpush1.msra.mxu0 0.0
    %667 = vmatprep.subr.mxu0 0.0
    %668 = vmatpush1.msra.mxu0 0.0
    %669 = vmatprep.subr.mxu0 0.0
    %670 = vmatpush1.msra.mxu0 0.0
    %671 = vmatprep.subr.mxu0 0.0
    %672 = vmatpush1.msra.mxu0 0.0
    %673 = vmatprep.subr.mxu0 0.0
    %674 = vmatpush1.msra.mxu0 0.0
    %675 = vmatprep.subr.mxu0 0.0
    %676 = vmatpush1.msra.mxu0 0.0
    %677 = vmatprep.subr.mxu0 0.0
    %678 = vmatpush1.msra.mxu0 0.0
    %679 = vmatprep.mubr.f32.mxu0 0.0
    %680 = vmatmul.mubr.f32.gmra.mrb[0].mxu0 %v516
    %v681 = vpop.f32.mrb[0].mxu0
    %v682 = vadd.f32 0.0, %v681
    %v683 = vpop.f32.mrb[0].mxu0
    %684 = vdwg.mxu0
    %686 = vrot.lane.b32.xlu0 %v614, 32
    %v687 = vpop.permute.xlu0 %686
    %v688 = vsel %vm244, %v687, 0
    %690 = vmatprep.subr.mxu0 0.0
    %691 = vmatpush1.msra.mxu0 %v219
    %692 = vmatprep.subr.mxu0 0.0
    %693 = vmatpush1.msra.mxu0 %v220
    %694 = vmatprep.subr.mxu0 0.0
    %695 = vmatpush1.msra.mxu0 %v221
    %696 = vmatprep.subr.mxu0 0.0
    %697 = vmatpush1.msra.mxu0 %v222
    %698 = vmatprep.subr.mxu0 0.0
    %699 = vmatpush1.msra.mxu0 0.0
    %700 = vmatprep.subr.mxu0 0.0
    %701 = vmatpush1.msra.mxu0 0.0
    %702 = vmatprep.subr.mxu0 0.0
    %703 = vmatpush1.msra.mxu0 0.0
    %704 = vmatprep.subr.mxu0 0.0
    %705 = vmatpush1.msra.mxu0 0.0
    %706 = vmatprep.subr.mxu0 0.0
    %707 = vmatpush1.msra.mxu0 0.0
    %708 = vmatprep.subr.mxu0 0.0
    %709 = vmatpush1.msra.mxu0 0.0
    %710 = vmatprep.subr.mxu0 0.0
    %711 = vmatpush1.msra.mxu0 0.0
    %712 = vmatprep.subr.mxu0 0.0
    %713 = vmatpush1.msra.mxu0 0.0
    %714 = vmatprep.subr.mxu0 0.0
    %715 = vmatpush1.msra.mxu0 0.0
    %716 = vmatprep.subr.mxu0 0.0
    %717 = vmatpush1.msra.mxu0 0.0
    %718 = vmatprep.subr.mxu0 0.0
    %719 = vmatpush1.msra.mxu0 0.0
    %720 = vmatprep.subr.mxu0 0.0
    %721 = vmatpush1.msra.mxu0 0.0
    %722 = vmatprep.subr.mxu0 0.0
    %723 = vmatpush1.msra.mxu0 0.0
    %724 = vmatprep.subr.mxu0 0.0
    %725 = vmatpush1.msra.mxu0 0.0
    %726 = vmatprep.subr.mxu0 0.0
    %727 = vmatpush1.msra.mxu0 0.0
    %728 = vmatprep.subr.mxu0 0.0
    %729 = vmatpush1.msra.mxu0 0.0
    %730 = vmatprep.subr.mxu0 0.0
    %731 = vmatpush1.msra.mxu0 0.0
    %732 = vmatprep.subr.mxu0 0.0
    %733 = vmatpush1.msra.mxu0 0.0
    %734 = vmatprep.subr.mxu0 0.0
    %735 = vmatpush1.msra.mxu0 0.0
    %736 = vmatprep.subr.mxu0 0.0
    %737 = vmatpush1.msra.mxu0 0.0
    %738 = vmatprep.subr.mxu0 0.0
    %739 = vmatpush1.msra.mxu0 0.0
    %740 = vmatprep.subr.mxu0 0.0
    %741 = vmatpush1.msra.mxu0 0.0
    %742 = vmatprep.subr.mxu0 0.0
    %743 = vmatpush1.msra.mxu0 0.0
    %744 = vmatprep.subr.mxu0 0.0
    %745 = vmatpush1.msra.mxu0 0.0
    %746 = vmatprep.subr.mxu0 0.0
    %747 = vmatpush1.msra.mxu0 0.0
    %748 = vmatprep.subr.mxu0 0.0
    %749 = vmatpush1.msra.mxu0 0.0
    %750 = vmatprep.subr.mxu0 0.0
    %751 = vmatpush1.msra.mxu0 0.0
    %752 = vmatprep.subr.mxu0 0.0
    %753 = vmatpush1.msra.mxu0 0.0
    %754 = vmatprep.mubr.f32.mxu0 0.0
    %755 = vmatmul.mubr.f32.gmra.mrb[0].mxu0 %v688
    %v756 = vpop.f32.mrb[0].mxu0
    %v757 = vadd.f32 0.0, %v756
    %v758 = vpop.f32.mrb[0].mxu0
    %759 = vdwg.mxu0
    %v760 = vadd.f32 %v321, %v757
    %v761 = vadd.f32 %v183, %v682
    %v762 = vmul.f32 %v761, 0.5
    %v763 = vtanh.pop %v762
    %v764 = vadd.f32 %v763, 1.0
    %v765 = vmul.f32 %v764, 0.5
    %v766 = vtanh.pop %v761
    %v767 = vmul.f32 %v765, %v506
    %769 = vrot.lane.b32.xlu0 %v766, 64
    %v770 = vpop.permute.xlu0 %769
    %v772 = vmul.f32 %v765, %v770
    %774 = vrot.lane.b32.xlu0 %v772, 32
    %v775 = vpop.permute.xlu0 %774
    %v777 = vadd.f32 %v767, %v775
    %v778 = vtanh.pop %v777
    %780 = vrot.lane.b32.xlu0 %v778, 64
    %v781 = vpop.permute.xlu0 %780
    %v783 = vmul.f32 %v765, %v781
    %785 = vrot.lane.b32.xlu0 %v783, 32
    %v786 = vpop.permute.xlu0 %785
    %v787 = vsel %vm244, %v786, 0
    %789 = vmatprep.subr.mxu0 0.0
    %790 = vmatpush1.msra.mxu0 %v215
    %791 = vmatprep.subr.mxu0 0.0
    %792 = vmatpush1.msra.mxu0 %v216
    %793 = vmatprep.subr.mxu0 0.0
    %794 = vmatpush1.msra.mxu0 %v217
    %795 = vmatprep.subr.mxu0 0.0
    %796 = vmatpush1.msra.mxu0 %v218
    %797 = vmatprep.subr.mxu0 0.0
    %798 = vmatpush1.msra.mxu0 0.0
    %799 = vmatprep.subr.mxu0 0.0
    %800 = vmatpush1.msra.mxu0 0.0
    %801 = vmatprep.subr.mxu0 0.0
    %802 = vmatpush1.msra.mxu0 0.0
    %803 = vmatprep.subr.mxu0 0.0
    %804 = vmatpush1.msra.mxu0 0.0
    %805 = vmatprep.subr.mxu0 0.0
    %806 = vmatpush1.msra.mxu0 0.0
    %807 = vmatprep.subr.mxu0 0.0
    %808 = vmatpush1.msra.mxu0 0.0
    %809 = vmatprep.subr.mxu0 0.0
    %810 = vmatpush1.msra.mxu0 0.0
    %811 = vmatprep.subr.mxu0 0.0
    %812 = vmatpush1.msra.mxu0 0.0
    %813 = vmatprep.subr.mxu0 0.0
    %814 = vmatpush1.msra.mxu0 0.0
    %815 = vmatprep.subr.mxu0 0.0
    %816 = vmatpush1.msra.mxu0 0.0
    %817 = vmatprep.subr.mxu0 0.0
    %818 = vmatpush1.msra.mxu0 0.0
    %819 = vmatprep.subr.mxu0 0.0
    %820 = vmatpush1.msra.mxu0 0.0
    %821 = vmatprep.subr.mxu0 0.0
    %822 = vmatpush1.msra.mxu0 0.0
    %823 = vmatprep.subr.mxu0 0.0
    %824 = vmatpush1.msra.mxu0 0.0
    %825 = vmatprep.subr.mxu0 0.0
    %826 = vmatpush1.msra.mxu0 0.0
    %827 = vmatprep.subr.mxu0 0.0
    %828 = vmatpush1.msra.mxu0 0.0
    %829 = vmatprep.subr.mxu0 0.0
    %830 = vmatpush1.msra.mxu0 0.0
    %831 = vmatprep.subr.mxu0 0.0
    %832 = vmatpush1.msra.mxu0 0.0
    %833 = vmatprep.subr.mxu0 0.0
    %834 = vmatpush1.msra.mxu0 0.0
    %835 = vmatprep.subr.mxu0 0.0
    %836 = vmatpush1.msra.mxu0 0.0
    %837 = vmatprep.subr.mxu0 0.0
    %838 = vmatpush1.msra.mxu0 0.0
    %839 = vmatprep.subr.mxu0 0.0
    %840 = vmatpush1.msra.mxu0 0.0
    %841 = vmatprep.subr.mxu0 0.0
    %842 = vmatpush1.msra.mxu0 0.0
    %843 = vmatprep.subr.mxu0 0.0
    %844 = vmatpush1.msra.mxu0 0.0
    %845 = vmatprep.subr.mxu0 0.0
    %846 = vmatpush1.msra.mxu0 0.0
    %847 = vmatprep.subr.mxu0 0.0
    %848 = vmatpush1.msra.mxu0 0.0
    %849 = vmatprep.subr.mxu0 0.0
    %850 = vmatpush1.msra.mxu0 0.0
    %851 = vmatprep.subr.mxu0 0.0
    %852 = vmatpush1.msra.mxu0 0.0
    %853 = vmatprep.mubr.f32.mxu0 0.0
    %854 = vmatmul.mubr.f32.gmra.mrb[0].mxu0 %v787
    %v855 = vpop.f32.mrb[0].mxu0
    %v856 = vadd.f32 0.0, %v855
    %v857 = vpop.f32.mrb[0].mxu0
    %858 = vdwg.mxu0
    %v859 = vadd.f32 %v760, %v856
    %v860 = vmul.f32 %v859, 0.5
    %v861 = vtanh.pop %v860
    %v862 = vadd.f32 %v861, 1.0
    %v863 = vmul.f32 %v862, 0.5
    %v864 = vtanh.pop %v859
    %v865 = vmul.f32 %v863, %v608
    %867 = vrot.lane.b32.xlu0 %v864, 64
    %v868 = vpop.permute.xlu0 %867
    %v870 = vmul.f32 %v863, %v868
    %872 = vrot.lane.b32.xlu0 %v870, 32
    %v873 = vpop.permute.xlu0 %872
    %v875 = vadd.f32 %v865, %v873
    %v876 = vtanh.pop %v875
    %878 = vrot.lane.b32.xlu0 %v876, 64
    %v879 = vpop.permute.xlu0 %878
    %v881 = vmul.f32 %v863, %v879
    %882 = vmatprep.subr.mxu0 0.0
    %883 = vmatpush1.msra.mxu0 %v211
    %884 = vmatprep.subr.mxu0 0.0
    %885 = vmatpush1.msra.mxu0 %v212
    %886 = vmatprep.subr.mxu0 0.0
    %887 = vmatpush1.msra.mxu0 %v213
    %888 = vmatprep.subr.mxu0 0.0
    %889 = vmatpush1.msra.mxu0 %v214
    %890 = vmatprep.subr.mxu0 0.0
    %891 = vmatpush1.msra.mxu0 0.0
    %892 = vmatprep.subr.mxu0 0.0
    %893 = vmatpush1.msra.mxu0 0.0
    %894 = vmatprep.subr.mxu0 0.0
    %895 = vmatpush1.msra.mxu0 0.0
    %896 = vmatprep.subr.mxu0 0.0
    %897 = vmatpush1.msra.mxu0 0.0
    %898 = vmatprep.subr.mxu0 0.0
    %899 = vmatpush1.msra.mxu0 0.0
    %900 = vmatprep.subr.mxu0 0.0
    %901 = vmatpush1.msra.mxu0 0.0
    %902 = vmatprep.subr.mxu0 0.0
    %903 = vmatpush1.msra.mxu0 0.0
    %904 = vmatprep.subr.mxu0 0.0
    %905 = vmatpush1.msra.mxu0 0.0
    %906 = vmatprep.subr.mxu0 0.0
    %907 = vmatpush1.msra.mxu0 0.0
    %908 = vmatprep.subr.mxu0 0.0
    %909 = vmatpush1.msra.mxu0 0.0
    %910 = vmatprep.subr.mxu0 0.0
    %911 = vmatpush1.msra.mxu0 0.0
    %912 = vmatprep.subr.mxu0 0.0
    %913 = vmatpush1.msra.mxu0 0.0
    %914 = vmatprep.subr.mxu0 0.0
    %915 = vmatpush1.msra.mxu0 0.0
    %916 = vmatprep.subr.mxu0 0.0
    %917 = vmatpush1.msra.mxu0 0.0
    %918 = vmatprep.subr.mxu0 0.0
    %919 = vmatpush1.msra.mxu0 0.0
    %920 = vmatprep.subr.mxu0 0.0
    %921 = vmatpush1.msra.mxu0 0.0
    %922 = vmatprep.subr.mxu0 0.0
    %923 = vmatpush1.msra.mxu0 0.0
    %924 = vmatprep.subr.mxu0 0.0
    %925 = vmatpush1.msra.mxu0 0.0
    %926 = vmatprep.subr.mxu0 0.0
    %927 = vmatpush1.msra.mxu0 0.0
    %928 = vmatprep.subr.mxu0 0.0
    %929 = vmatpush1.msra.mxu0 0.0
    %930 = vmatprep.subr.mxu0 0.0
    %931 = vmatpush1.msra.mxu0 0.0
    %932 = vmatprep.subr.mxu0 0.0
    %933 = vmatpush1.msra.mxu0 0.0
    %934 = vmatprep.subr.mxu0 0.0
    %935 = vmatpush1.msra.mxu0 0.0
    %936 = vmatprep.subr.mxu0 0.0
    %937 = vmatpush1.msra.mxu0 0.0
    %938 = vmatprep.subr.mxu0 0.0
    %939 = vmatpush1.msra.mxu0 0.0
    %940 = vmatprep.subr.mxu0 0.0
    %941 = vmatpush1.msra.mxu0 0.0
    %942 = vmatprep.subr.mxu0 0.0
    %943 = vmatpush1.msra.mxu0 0.0
    %944 = vmatprep.subr.mxu0 0.0
    %945 = vmatpush1.msra.mxu0 0.0
    %946 = vmatprep.mubr.f32.mxu0 0.0
    %947 = vmatmul.mubr.f32.gmra.mrb[0].mxu0 %v787
    %v948 = vpop.f32.mrb[0].mxu0
    %v949 = vadd.f32 0.0, %v948
    %v950 = vpop.f32.mrb[0].mxu0
    %951 = vdwg.mxu0
    %953 = vrot.lane.b32.xlu0 %v881, 32
    %v954 = vpop.permute.xlu0 %953
    %v955 = vsel %vm244, %v954, 0
    %957 = vmatprep.subr.mxu0 0.0
    %958 = vmatpush1.msra.mxu0 %v219
    %959 = vmatprep.subr.mxu0 0.0
    %960 = vmatpush1.msra.mxu0 %v220
    %961 = vmatprep.subr.mxu0 0.0
    %962 = vmatpush1.msra.mxu0 %v221
    %963 = vmatprep.subr.mxu0 0.0
    %964 = vmatpush1.msra.mxu0 %v222
    %965 = vmatprep.subr.mxu0 0.0
    %966 = vmatpush1.msra.mxu0 0.0
    %967 = vmatprep.subr.mxu0 0.0
    %968 = vmatpush1.msra.mxu0 0.0
    %969 = vmatprep.subr.mxu0 0.0
    %970 = vmatpush1.msra.mxu0 0.0
    %971 = vmatprep.subr.mxu0 0.0
    %972 = vmatpush1.msra.mxu0 0.0
    %973 = vmatprep.subr.mxu0 0.0
    %974 = vmatpush1.msra.mxu0 0.0
    %975 = vmatprep.subr.mxu0 0.0
    %976 = vmatpush1.msra.mxu0 0.0
    %977 = vmatprep.subr.mxu0 0.0
    %978 = vmatpush1.msra.mxu0 0.0
    %979 = vmatprep.subr.mxu0 0.0
    %980 = vmatpush1.msra.mxu0 0.0
    %981 = vmatprep.subr.mxu0 0.0
    %982 = vmatpush1.msra.mxu0 0.0
    %983 = vmatprep.subr.mxu0 0.0
    %984 = vmatpush1.msra.mxu0 0.0
    %985 = vmatprep.subr.mxu0 0.0
    %986 = vmatpush1.msra.mxu0 0.0
    %987 = vmatprep.subr.mxu0 0.0
    %988 = vmatpush1.msra.mxu0 0.0
    %989 = vmatprep.subr.mxu0 0.0
    %990 = vmatpush1.msra.mxu0 0.0
    %991 = vmatprep.subr.mxu0 0.0
    %992 = vmatpush1.msra.mxu0 0.0
    %993 = vmatprep.subr.mxu0 0.0
    %994 = vmatpush1.msra.mxu0 0.0
    %995 = vmatprep.subr.mxu0 0.0
    %996 = vmatpush1.msra.mxu0 0.0
    %997 = vmatprep.subr.mxu0 0.0
    %998 = vmatpush1.msra.mxu0 0.0
    %999 = vmatprep.subr.mxu0 0.0
    %1000 = vmatpush1.msra.mxu0 0.0
    %1001 = vmatprep.subr.mxu0 0.0
    %1002 = vmatpush1.msra.mxu0 0.0
    %1003 = vmatprep.subr.mxu0 0.0
    %1004 = vmatpush1.msra.mxu0 0.0
    %1005 = vmatprep.subr.mxu0 0.0
    %1006 = vmatpush1.msra.mxu0 0.0
    %1007 = vmatprep.subr.mxu0 0.0
    %1008 = vmatpush1.msra.mxu0 0.0
    %1009 = vmatprep.subr.mxu0 0.0
    %1010 = vmatpush1.msra.mxu0 0.0
    %1011 = vmatprep.subr.mxu0 0.0
    %1012 = vmatpush1.msra.mxu0 0.0
    %1013 = vmatprep.subr.mxu0 0.0
    %1014 = vmatpush1.msra.mxu0 0.0
    %1015 = vmatprep.subr.mxu0 0.0
    %1016 = vmatpush1.msra.mxu0 0.0
    %1017 = vmatprep.subr.mxu0 0.0
    %1018 = vmatpush1.msra.mxu0 0.0
    %1019 = vmatprep.subr.mxu0 0.0
    %1020 = vmatpush1.msra.mxu0 0.0
    %1021 = vmatprep.mubr.f32.mxu0 0.0
    %1022 = vmatmul.mubr.f32.gmra.mrb[0].mxu0 %v955
    %v1023 = vpop.f32.mrb[0].mxu0
    %v1024 = vadd.f32 0.0, %v1023
    %v1025 = vpop.f32.mrb[0].mxu0
    %1026 = vdwg.mxu0
    %v1027 = vadd.f32 %v321, %v1024
    %v1028 = vadd.f32 %v188, %v949
    %v1029 = vmul.f32 %v1028, 0.5
    %v1030 = vtanh.pop %v1029
    %v1031 = vadd.f32 %v1030, 1.0
    %v1032 = vmul.f32 %v1031, 0.5
    %v1033 = vtanh.pop %v1028
    %v1034 = vmul.f32 %v1032, %v777
    %1036 = vrot.lane.b32.xlu0 %v1033, 64
    %v1037 = vpop.permute.xlu0 %1036
    %v1039 = vmul.f32 %v1032, %v1037
    %1041 = vrot.lane.b32.xlu0 %v1039, 32
    %v1042 = vpop.permute.xlu0 %1041
    %v1044 = vadd.f32 %v1034, %v1042
    %v1045 = vtanh.pop %v1044
    %1047 = vrot.lane.b32.xlu0 %v1045, 64
    %v1048 = vpop.permute.xlu0 %1047
    %v1050 = vmul.f32 %v1032, %v1048
    %1052 = vrot.lane.b32.xlu0 %v1050, 32
    %v1053 = vpop.permute.xlu0 %1052
    %v1054 = vsel %vm244, %v1053, 0
    %1056 = vmatprep.subr.mxu0 0.0
    %1057 = vmatpush1.msra.mxu0 %v215
    %1058 = vmatprep.subr.mxu0 0.0
    %1059 = vmatpush1.msra.mxu0 %v216
    %1060 = vmatprep.subr.mxu0 0.0
    %1061 = vmatpush1.msra.mxu0 %v217
    %1062 = vmatprep.subr.mxu0 0.0
    %1063 = vmatpush1.msra.mxu0 %v218
    %1064 = vmatprep.subr.mxu0 0.0
    %1065 = vmatpush1.msra.mxu0 0.0
    %1066 = vmatprep.subr.mxu0 0.0
    %1067 = vmatpush1.msra.mxu0 0.0
    %1068 = vmatprep.subr.mxu0 0.0
    %1069 = vmatpush1.msra.mxu0 0.0
    %1070 = vmatprep.subr.mxu0 0.0
    %1071 = vmatpush1.msra.mxu0 0.0
    %1072 = vmatprep.subr.mxu0 0.0
    %1073 = vmatpush1.msra.mxu0 0.0
    %1074 = vmatprep.subr.mxu0 0.0
    %1075 = vmatpush1.msra.mxu0 0.0
    %1076 = vmatprep.subr.mxu0 0.0
    %1077 = vmatpush1.msra.mxu0 0.0
    %1078 = vmatprep.subr.mxu0 0.0
    %1079 = vmatpush1.msra.mxu0 0.0
    %1080 = vmatprep.subr.mxu0 0.0
    %1081 = vmatpush1.msra.mxu0 0.0
    %1082 = vmatprep.subr.mxu0 0.0
    %1083 = vmatpush1.msra.mxu0 0.0
    %1084 = vmatprep.subr.mxu0 0.0
    %1085 = vmatpush1.msra.mxu0 0.0
    %1086 = vmatprep.subr.mxu0 0.0
    %1087 = vmatpush1.msra.mxu0 0.0
    %1088 = vmatprep.subr.mxu0 0.0
    %1089 = vmatpush1.msra.mxu0 0.0
    %1090 = vmatprep.subr.mxu0 0.0
    %1091 = vmatpush1.msra.mxu0 0.0
    %1092 = vmatprep.subr.mxu0 0.0
    %1093 = vmatpush1.msra.mxu0 0.0
    %1094 = vmatprep.subr.mxu0 0.0
    %1095 = vmatpush1.msra.mxu0 0.0
    %1096 = vmatprep.subr.mxu0 0.0
    %1097 = vmatpush1.msra.mxu0 0.0
    %1098 = vmatprep.subr.mxu0 0.0
    %1099 = vmatpush1.msra.mxu0 0.0
    %1100 = vmatprep.subr.mxu0 0.0
    %1101 = vmatpush1.msra.mxu0 0.0
    %1102 = vmatprep.subr.mxu0 0.0
    %1103 = vmatpush1.msra.mxu0 0.0
    %1104 = vmatprep.subr.mxu0 0.0
    %1105 = vmatpush1.msra.mxu0 0.0
    %1106 = vmatprep.subr.mxu0 0.0
    %1107 = vmatpush1.msra.mxu0 0.0
    %1108 = vmatprep.subr.mxu0 0.0
    %1109 = vmatpush1.msra.mxu0 0.0
    %1110 = vmatprep.subr.mxu0 0.0
    %1111 = vmatpush1.msra.mxu0 0.0
    %1112 = vmatprep.subr.mxu0 0.0
    %1113 = vmatpush1.msra.mxu0 0.0
    %1114 = vmatprep.subr.mxu0 0.0
    %1115 = vmatpush1.msra.mxu0 0.0
    %1116 = vmatprep.subr.mxu0 0.0
    %1117 = vmatpush1.msra.mxu0 0.0
    %1118 = vmatprep.subr.mxu0 0.0
    %1119 = vmatpush1.msra.mxu0 0.0
    %1120 = vmatprep.mubr.f32.mxu0 0.0
    %1121 = vmatmul.mubr.f32.gmra.mrb[0].mxu0 %v1054
    %v1122 = vpop.f32.mrb[0].mxu0
    %v1123 = vadd.f32 0.0, %v1122
    %v1124 = vpop.f32.mrb[0].mxu0
    %1125 = vdwg.mxu0
    %v1126 = vadd.f32 %v1027, %v1123
    %v1127 = vmul.f32 %v1126, 0.5
    %v1128 = vtanh.pop %v1127
    %v1129 = vadd.f32 %v1128, 1.0
    %v1130 = vmul.f32 %v1129, 0.5
    %v1131 = vtanh.pop %v1126
    %v1132 = vmul.f32 %v1130, %v875
    %1134 = vrot.lane.b32.xlu0 %v1131, 64
    %v1135 = vpop.permute.xlu0 %1134
    %v1137 = vmul.f32 %v1130, %v1135
    %1139 = vrot.lane.b32.xlu0 %v1137, 32
    %v1140 = vpop.permute.xlu0 %1139
    %v1142 = vadd.f32 %v1132, %v1140
    %v1143 = vtanh.pop %v1142
    %1145 = vrot.lane.b32.xlu0 %v1143, 64
    %v1146 = vpop.permute.xlu0 %1145
    %v1148 = vmul.f32 %v1130, %v1146
    %1149 = vmatprep.subr.mxu0 0.0
    %1150 = vmatpush1.msra.mxu0 %v211
    %1151 = vmatprep.subr.mxu0 0.0
    %1152 = vmatpush1.msra.mxu0 %v212
    %1153 = vmatprep.subr.mxu0 0.0
    %1154 = vmatpush1.msra.mxu0 %v213
    %1155 = vmatprep.subr.mxu0 0.0
    %1156 = vmatpush1.msra.mxu0 %v214
    %1157 = vmatprep.subr.mxu0 0.0
    %1158 = vmatpush1.msra.mxu0 0.0
    %1159 = vmatprep.subr.mxu0 0.0
    %1160 = vmatpush1.msra.mxu0 0.0
    %1161 = vmatprep.subr.mxu0 0.0
    %1162 = vmatpush1.msra.mxu0 0.0
    %1163 = vmatprep.subr.mxu0 0.0
    %1164 = vmatpush1.msra.mxu0 0.0
    %1165 = vmatprep.subr.mxu0 0.0
    %1166 = vmatpush1.msra.mxu0 0.0
    %1167 = vmatprep.subr.mxu0 0.0
    %1168 = vmatpush1.msra.mxu0 0.0
    %1169 = vmatprep.subr.mxu0 0.0
    %1170 = vmatpush1.msra.mxu0 0.0
    %1171 = vmatprep.subr.mxu0 0.0
    %1172 = vmatpush1.msra.mxu0 0.0
    %1173 = vmatprep.subr.mxu0 0.0
    %1174 = vmatpush1.msra.mxu0 0.0
    %1175 = vmatprep.subr.mxu0 0.0
    %1176 = vmatpush1.msra.mxu0 0.0
    %1177 = vmatprep.subr.mxu0 0.0
    %1178 = vmatpush1.msra.mxu0 0.0
    %1179 = vmatprep.subr.mxu0 0.0
    %1180 = vmatpush1.msra.mxu0 0.0
    %1181 = vmatprep.subr.mxu0 0.0
    %1182 = vmatpush1.msra.mxu0 0.0
    %1183 = vmatprep.subr.mxu0 0.0
    %1184 = vmatpush1.msra.mxu0 0.0
    %1185 = vmatprep.subr.mxu0 0.0
    %1186 = vmatpush1.msra.mxu0 0.0
    %1187 = vmatprep.subr.mxu0 0.0
    %1188 = vmatpush1.msra.mxu0 0.0
    %1189 = vmatprep.subr.mxu0 0.0
    %1190 = vmatpush1.msra.mxu0 0.0
    %1191 = vmatprep.subr.mxu0 0.0
    %1192 = vmatpush1.msra.mxu0 0.0
    %1193 = vmatprep.subr.mxu0 0.0
    %1194 = vmatpush1.msra.mxu0 0.0
    %1195 = vmatprep.subr.mxu0 0.0
    %1196 = vmatpush1.msra.mxu0 0.0
    %1197 = vmatprep.subr.mxu0 0.0
    %1198 = vmatpush1.msra.mxu0 0.0
    %1199 = vmatprep.subr.mxu0 0.0
    %1200 = vmatpush1.msra.mxu0 0.0
    %1201 = vmatprep.subr.mxu0 0.0
    %1202 = vmatpush1.msra.mxu0 0.0
    %1203 = vmatprep.subr.mxu0 0.0
    %1204 = vmatpush1.msra.mxu0 0.0
    %1205 = vmatprep.subr.mxu0 0.0
    %1206 = vmatpush1.msra.mxu0 0.0
    %1207 = vmatprep.subr.mxu0 0.0
    %1208 = vmatpush1.msra.mxu0 0.0
    %1209 = vmatprep.subr.mxu0 0.0
    %1210 = vmatpush1.msra.mxu0 0.0
    %1211 = vmatprep.subr.mxu0 0.0
    %1212 = vmatpush1.msra.mxu0 0.0
    %1213 = vmatprep.mubr.f32.mxu0 0.0
    %1214 = vmatmul.mubr.f32.gmra.mrb[0].mxu0 %v1054
    %v1215 = vpop.f32.mrb[0].mxu0
    %v1216 = vadd.f32 0.0, %v1215
    %v1217 = vpop.f32.mrb[0].mxu0
    %1218 = vdwg.mxu0
    %1220 = vrot.lane.b32.xlu0 %v1148, 32
    %v1221 = vpop.permute.xlu0 %1220
    %v1222 = vsel %vm244, %v1221, 0
    %1224 = vmatprep.subr.mxu0 0.0
    %1225 = vmatpush1.msra.mxu0 %v219
    %1226 = vmatprep.subr.mxu0 0.0
    %1227 = vmatpush1.msra.mxu0 %v220
    %1228 = vmatprep.subr.mxu0 0.0
    %1229 = vmatpush1.msra.mxu0 %v221
    %1230 = vmatprep.subr.mxu0 0.0
    %1231 = vmatpush1.msra.mxu0 %v222
    %1232 = vmatprep.subr.mxu0 0.0
    %1233 = vmatpush1.msra.mxu0 0.0
    %1234 = vmatprep.subr.mxu0 0.0
    %1235 = vmatpush1.msra.mxu0 0.0
    %1236 = vmatprep.subr.mxu0 0.0
    %1237 = vmatpush1.msra.mxu0 0.0
    %1238 = vmatprep.subr.mxu0 0.0
    %1239 = vmatpush1.msra.mxu0 0.0
    %1240 = vmatprep.subr.mxu0 0.0
    %1241 = vmatpush1.msra.mxu0 0.0
    %1242 = vmatprep.subr.mxu0 0.0
    %1243 = vmatpush1.msra.mxu0 0.0
    %1244 = vmatprep.subr.mxu0 0.0
    %1245 = vmatpush1.msra.mxu0 0.0
    %1246 = vmatprep.subr.mxu0 0.0
    %1247 = vmatpush1.msra.mxu0 0.0
    %1248 = vmatprep.subr.mxu0 0.0
    %1249 = vmatpush1.msra.mxu0 0.0
    %1250 = vmatprep.subr.mxu0 0.0
    %1251 = vmatpush1.msra.mxu0 0.0
    %1252 = vmatprep.subr.mxu0 0.0
    %1253 = vmatpush1.msra.mxu0 0.0
    %1254 = vmatprep.subr.mxu0 0.0
    %1255 = vmatpush1.msra.mxu0 0.0
    %1256 = vmatprep.subr.mxu0 0.0
    %1257 = vmatpush1.msra.mxu0 0.0
    %1258 = vmatprep.subr.mxu0 0.0
    %1259 = vmatpush1.msra.mxu0 0.0
    %1260 = vmatprep.subr.mxu0 0.0
    %1261 = vmatpush1.msra.mxu0 0.0
    %1262 = vmatprep.subr.mxu0 0.0
    %1263 = vmatpush1.msra.mxu0 0.0
    %1264 = vmatprep.subr.mxu0 0.0
    %1265 = vmatpush1.msra.mxu0 0.0
    %1266 = vmatprep.subr.mxu0 0.0
    %1267 = vmatpush1.msra.mxu0 0.0
    %1268 = vmatprep.subr.mxu0 0.0
    %1269 = vmatpush1.msra.mxu0 0.0
    %1270 = vmatprep.subr.mxu0 0.0
    %1271 = vmatpush1.msra.mxu0 0.0
    %1272 = vmatprep.subr.mxu0 0.0
    %1273 = vmatpush1.msra.mxu0 0.0
    %1274 = vmatprep.subr.mxu0 0.0
    %1275 = vmatpush1.msra.mxu0 0.0
    %1276 = vmatprep.subr.mxu0 0.0
    %1277 = vmatpush1.msra.mxu0 0.0
    %1278 = vmatprep.subr.mxu0 0.0
    %1279 = vmatpush1.msra.mxu0 0.0
    %1280 = vmatprep.subr.mxu0 0.0
    %1281 = vmatpush1.msra.mxu0 0.0
    %1282 = vmatprep.subr.mxu0 0.0
    %1283 = vmatpush1.msra.mxu0 0.0
    %1284 = vmatprep.subr.mxu0 0.0
    %1285 = vmatpush1.msra.mxu0 0.0
    %1286 = vmatprep.subr.mxu0 0.0
    %1287 = vmatpush1.msra.mxu0 0.0
    %1288 = vmatprep.mubr.f32.mxu0 0.0
    %1289 = vmatmul.mubr.f32.gmra.mrb[0].mxu0 %v1222
    %v1290 = vpop.f32.mrb[0].mxu0
    %v1291 = vadd.f32 0.0, %v1290
    %v1292 = vpop.f32.mrb[0].mxu0
    %1293 = vdwg.mxu0
    %v1294 = vadd.f32 %v321, %v1291
    %v1295 = vadd.f32 %v193, %v1216
    %v1296 = vmul.f32 %v1295, 0.5
    %v1297 = vtanh.pop %v1296
    %v1298 = vadd.f32 %v1297, 1.0
    %v1299 = vmul.f32 %v1298, 0.5
    %v1300 = vtanh.pop %v1295
    %v1301 = vmul.f32 %v1299, %v1044
    %1303 = vrot.lane.b32.xlu0 %v1300, 64
    %v1304 = vpop.permute.xlu0 %1303
    %v1306 = vmul.f32 %v1299, %v1304
    %1308 = vrot.lane.b32.xlu0 %v1306, 32
    %v1309 = vpop.permute.xlu0 %1308
    %v1311 = vadd.f32 %v1301, %v1309
    %v1312 = vtanh.pop %v1311
    %1314 = vrot.lane.b32.xlu0 %v1312, 64
    %v1315 = vpop.permute.xlu0 %1314
    %v1317 = vmul.f32 %v1299, %v1315
    %1319 = vrot.lane.b32.xlu0 %v1317, 32
    %v1320 = vpop.permute.xlu0 %1319
    %v1321 = vsel %vm244, %v1320, 0
    %1323 = vmatprep.subr.mxu0 0.0
    %1324 = vmatpush1.msra.mxu0 %v215
    %1325 = vmatprep.subr.mxu0 0.0
    %1326 = vmatpush1.msra.mxu0 %v216
    %1327 = vmatprep.subr.mxu0 0.0
    %1328 = vmatpush1.msra.mxu0 %v217
    %1329 = vmatprep.subr.mxu0 0.0
    %1330 = vmatpush1.msra.mxu0 %v218
    %1331 = vmatprep.subr.mxu0 0.0
    %1332 = vmatpush1.msra.mxu0 0.0
    %1333 = vmatprep.subr.mxu0 0.0
    %1334 = vmatpush1.msra.mxu0 0.0
    %1335 = vmatprep.subr.mxu0 0.0
    %1336 = vmatpush1.msra.mxu0 0.0
    %1337 = vmatprep.subr.mxu0 0.0
    %1338 = vmatpush1.msra.mxu0 0.0
    %1339 = vmatprep.subr.mxu0 0.0
    %1340 = vmatpush1.msra.mxu0 0.0
    %1341 = vmatprep.subr.mxu0 0.0
    %1342 = vmatpush1.msra.mxu0 0.0
    %1343 = vmatprep.subr.mxu0 0.0
    %1344 = vmatpush1.msra.mxu0 0.0
    %1345 = vmatprep.subr.mxu0 0.0
    %1346 = vmatpush1.msra.mxu0 0.0
    %1347 = vmatprep.subr.mxu0 0.0
    %1348 = vmatpush1.msra.mxu0 0.0
    %1349 = vmatprep.subr.mxu0 0.0
    %1350 = vmatpush1.msra.mxu0 0.0
    %1351 = vmatprep.subr.mxu0 0.0
    %1352 = vmatpush1.msra.mxu0 0.0
    %1353 = vmatprep.subr.mxu0 0.0
    %1354 = vmatpush1.msra.mxu0 0.0
    %1355 = vmatprep.subr.mxu0 0.0
    %1356 = vmatpush1.msra.mxu0 0.0
    %1357 = vmatprep.subr.mxu0 0.0
    %1358 = vmatpush1.msra.mxu0 0.0
    %1359 = vmatprep.subr.mxu0 0.0
    %1360 = vmatpush1.msra.mxu0 0.0
    %1361 = vmatprep.subr.mxu0 0.0
    %1362 = vmatpush1.msra.mxu0 0.0
    %1363 = vmatprep.subr.mxu0 0.0
    %1364 = vmatpush1.msra.mxu0 0.0
    %1365 = vmatprep.subr.mxu0 0.0
    %1366 = vmatpush1.msra.mxu0 0.0
    %1367 = vmatprep.subr.mxu0 0.0
    %1368 = vmatpush1.msra.mxu0 0.0
    %1369 = vmatprep.subr.mxu0 0.0
    %1370 = vmatpush1.msra.mxu0 0.0
    %1371 = vmatprep.subr.mxu0 0.0
    %1372 = vmatpush1.msra.mxu0 0.0
    %1373 = vmatprep.subr.mxu0 0.0
    %1374 = vmatpush1.msra.mxu0 0.0
    %1375 = vmatprep.subr.mxu0 0.0
    %1376 = vmatpush1.msra.mxu0 0.0
    %1377 = vmatprep.subr.mxu0 0.0
    %1378 = vmatpush1.msra.mxu0 0.0
    %1379 = vmatprep.subr.mxu0 0.0
    %1380 = vmatpush1.msra.mxu0 0.0
    %1381 = vmatprep.subr.mxu0 0.0
    %1382 = vmatpush1.msra.mxu0 0.0
    %1383 = vmatprep.subr.mxu0 0.0
    %1384 = vmatpush1.msra.mxu0 0.0
    %1385 = vmatprep.subr.mxu0 0.0
    %1386 = vmatpush1.msra.mxu0 0.0
    %1387 = vmatprep.mubr.f32.mxu0 0.0
    %1388 = vmatmul.mubr.f32.gmra.mrb[0].mxu0 %v1321
    %v1389 = vpop.f32.mrb[0].mxu0
    %v1390 = vadd.f32 0.0, %v1389
    %v1391 = vpop.f32.mrb[0].mxu0
    %1392 = vdwg.mxu0
    %v1393 = vadd.f32 %v1294, %v1390
    %v1394 = vmul.f32 %v1393, 0.5
    %v1395 = vtanh.pop %v1394
    %v1396 = vadd.f32 %v1395, 1.0
    %v1397 = vmul.f32 %v1396, 0.5
    %v1398 = vtanh.pop %v1393
    %v1399 = vmul.f32 %v1397, %v1142
    %1401 = vrot.lane.b32.xlu0 %v1398, 64
    %v1402 = vpop.permute.xlu0 %1401
    %v1404 = vmul.f32 %v1397, %v1402
    %1406 = vrot.lane.b32.xlu0 %v1404, 32
    %v1407 = vpop.permute.xlu0 %1406
    %v1409 = vadd.f32 %v1399, %v1407
    %v1410 = vtanh.pop %v1409
    %1412 = vrot.lane.b32.xlu0 %v1410, 64
    %v1413 = vpop.permute.xlu0 %1412
    %v1415 = vmul.f32 %v1397, %v1413
    %1416 = vmatprep.subr.mxu0 0.0
    %1417 = vmatpush1.msra.mxu0 %v211
    %1418 = vmatprep.subr.mxu0 0.0
    %1419 = vmatpush1.msra.mxu0 %v212
    %1420 = vmatprep.subr.mxu0 0.0
    %1421 = vmatpush1.msra.mxu0 %v213
    %1422 = vmatprep.subr.mxu0 0.0
    %1423 = vmatpush1.msra.mxu0 %v214
    %1424 = vmatprep.subr.mxu0 0.0
    %1425 = vmatpush1.msra.mxu0 0.0
    %1426 = vmatprep.subr.mxu0 0.0
    %1427 = vmatpush1.msra.mxu0 0.0
    %1428 = vmatprep.subr.mxu0 0.0
    %1429 = vmatpush1.msra.mxu0 0.0
    %1430 = vmatprep.subr.mxu0 0.0
    %1431 = vmatpush1.msra.mxu0 0.0
    %1432 = vmatprep.subr.mxu0 0.0
    %1433 = vmatpush1.msra.mxu0 0.0
    %1434 = vmatprep.subr.mxu0 0.0
    %1435 = vmatpush1.msra.mxu0 0.0
    %1436 = vmatprep.subr.mxu0 0.0
    %1437 = vmatpush1.msra.mxu0 0.0
    %1438 = vmatprep.subr.mxu0 0.0
    %1439 = vmatpush1.msra.mxu0 0.0
    %1440 = vmatprep.subr.mxu0 0.0
    %1441 = vmatpush1.msra.mxu0 0.0
    %1442 = vmatprep.subr.mxu0 0.0
    %1443 = vmatpush1.msra.mxu0 0.0
    %1444 = vmatprep.subr.mxu0 0.0
    %1445 = vmatpush1.msra.mxu0 0.0
    %1446 = vmatprep.subr.mxu0 0.0
    %1447 = vmatpush1.msra.mxu0 0.0
    %1448 = vmatprep.subr.mxu0 0.0
    %1449 = vmatpush1.msra.mxu0 0.0
    %1450 = vmatprep.subr.mxu0 0.0
    %1451 = vmatpush1.msra.mxu0 0.0
    %1452 = vmatprep.subr.mxu0 0.0
    %1453 = vmatpush1.msra.mxu0 0.0
    %1454 = vmatprep.subr.mxu0 0.0
    %1455 = vmatpush1.msra.mxu0 0.0
    %1456 = vmatprep.subr.mxu0 0.0
    %1457 = vmatpush1.msra.mxu0 0.0
    %1458 = vmatprep.subr.mxu0 0.0
    %1459 = vmatpush1.msra.mxu0 0.0
    %1460 = vmatprep.subr.mxu0 0.0
    %1461 = vmatpush1.msra.mxu0 0.0
    %1462 = vmatprep.subr.mxu0 0.0
    %1463 = vmatpush1.msra.mxu0 0.0
    %1464 = vmatprep.subr.mxu0 0.0
    %1465 = vmatpush1.msra.mxu0 0.0
    %1466 = vmatprep.subr.mxu0 0.0
    %1467 = vmatpush1.msra.mxu0 0.0
    %1468 = vmatprep.subr.mxu0 0.0
    %1469 = vmatpush1.msra.mxu0 0.0
    %1470 = vmatprep.subr.mxu0 0.0
    %1471 = vmatpush1.msra.mxu0 0.0
    %1472 = vmatprep.subr.mxu0 0.0
    %1473 = vmatpush1.msra.mxu0 0.0
    %1474 = vmatprep.subr.mxu0 0.0
    %1475 = vmatpush1.msra.mxu0 0.0
    %1476 = vmatprep.subr.mxu0 0.0
    %1477 = vmatpush1.msra.mxu0 0.0
    %1478 = vmatprep.subr.mxu0 0.0
    %1479 = vmatpush1.msra.mxu0 0.0
    %1480 = vmatprep.mubr.f32.mxu0 0.0
    %1481 = vmatmul.mubr.f32.gmra.mrb[0].mxu0 %v1321
    %v1482 = vpop.f32.mrb[0].mxu0
    %v1483 = vadd.f32 0.0, %v1482
    %v1484 = vpop.f32.mrb[0].mxu0
    %1485 = vdwg.mxu0
    %1487 = vrot.lane.b32.xlu0 %v1415, 32
    %v1488 = vpop.permute.xlu0 %1487
    %v1489 = vsel %vm244, %v1488, 0
    %1491 = vmatprep.subr.mxu0 0.0
    %1492 = vmatpush1.msra.mxu0 %v219
    %1493 = vmatprep.subr.mxu0 0.0
    %1494 = vmatpush1.msra.mxu0 %v220
    %1495 = vmatprep.subr.mxu0 0.0
    %1496 = vmatpush1.msra.mxu0 %v221
    %1497 = vmatprep.subr.mxu0 0.0
    %1498 = vmatpush1.msra.mxu0 %v222
    %1499 = vmatprep.subr.mxu0 0.0
    %1500 = vmatpush1.msra.mxu0 0.0
    %1501 = vmatprep.subr.mxu0 0.0
    %1502 = vmatpush1.msra.mxu0 0.0
    %1503 = vmatprep.subr.mxu0 0.0
    %1504 = vmatpush1.msra.mxu0 0.0
    %1505 = vmatprep.subr.mxu0 0.0
    %1506 = vmatpush1.msra.mxu0 0.0
    %1507 = vmatprep.subr.mxu0 0.0
    %1508 = vmatpush1.msra.mxu0 0.0
    %1509 = vmatprep.subr.mxu0 0.0
    %1510 = vmatpush1.msra.mxu0 0.0
    %1511 = vmatprep.subr.mxu0 0.0
    %1512 = vmatpush1.msra.mxu0 0.0
    %1513 = vmatprep.subr.mxu0 0.0
    %1514 = vmatpush1.msra.mxu0 0.0
    %1515 = vmatprep.subr.mxu0 0.0
    %1516 = vmatpush1.msra.mxu0 0.0
    %1517 = vmatprep.subr.mxu0 0.0
    %1518 = vmatpush1.msra.mxu0 0.0
    %1519 = vmatprep.subr.mxu0 0.0
    %1520 = vmatpush1.msra.mxu0 0.0
    %1521 = vmatprep.subr.mxu0 0.0
    %1522 = vmatpush1.msra.mxu0 0.0
    %1523 = vmatprep.subr.mxu0 0.0
    %1524 = vmatpush1.msra.mxu0 0.0
    %1525 = vmatprep.subr.mxu0 0.0
    %1526 = vmatpush1.msra.mxu0 0.0
    %1527 = vmatprep.subr.mxu0 0.0
    %1528 = vmatpush1.msra.mxu0 0.0
    %1529 = vmatprep.subr.mxu0 0.0
    %1530 = vmatpush1.msra.mxu0 0.0
    %1531 = vmatprep.subr.mxu0 0.0
    %1532 = vmatpush1.msra.mxu0 0.0
    %1533 = vmatprep.subr.mxu0 0.0
    %1534 = vmatpush1.msra.mxu0 0.0
    %1535 = vmatprep.subr.mxu0 0.0
    %1536 = vmatpush1.msra.mxu0 0.0
    %1537 = vmatprep.subr.mxu0 0.0
    %1538 = vmatpush1.msra.mxu0 0.0
    %1539 = vmatprep.subr.mxu0 0.0
    %1540 = vmatpush1.msra.mxu0 0.0
    %1541 = vmatprep.subr.mxu0 0.0
    %1542 = vmatpush1.msra.mxu0 0.0
    %1543 = vmatprep.subr.mxu0 0.0
    %1544 = vmatpush1.msra.mxu0 0.0
    %1545 = vmatprep.subr.mxu0 0.0
    %1546 = vmatpush1.msra.mxu0 0.0
    %1547 = vmatprep.subr.mxu0 0.0
    %1548 = vmatpush1.msra.mxu0 0.0
    %1549 = vmatprep.subr.mxu0 0.0
    %1550 = vmatpush1.msra.mxu0 0.0
    %1551 = vmatprep.subr.mxu0 0.0
    %1552 = vmatpush1.msra.mxu0 0.0
    %1553 = vmatprep.subr.mxu0 0.0
    %1554 = vmatpush1.msra.mxu0 0.0
    %1555 = vmatprep.mubr.f32.mxu0 0.0
    %1556 = vmatmul.mubr.f32.gmra.mrb[0].mxu0 %v1489
    %v1557 = vpop.f32.mrb[0].mxu0
    %v1558 = vadd.f32 0.0, %v1557
    %v1559 = vpop.f32.mrb[0].mxu0
    %1560 = vdwg.mxu0
    %v1561 = vadd.f32 %v321, %v1558
    %v1562 = vadd.f32 %v198, %v1483
    %v1563 = vmul.f32 %v1562, 0.5
    %v1564 = vtanh.pop %v1563
    %v1565 = vadd.f32 %v1564, 1.0
    %v1566 = vmul.f32 %v1565, 0.5
    %v1567 = vtanh.pop %v1562
    %v1568 = vmul.f32 %v1566, %v1311
    %1570 = vrot.lane.b32.xlu0 %v1567, 64
    %v1571 = vpop.permute.xlu0 %1570
    %v1573 = vmul.f32 %v1566, %v1571
    %1575 = vrot.lane.b32.xlu0 %v1573, 32
    %v1576 = vpop.permute.xlu0 %1575
    %v1578 = vadd.f32 %v1568, %v1576
    %v1579 = vtanh.pop %v1578
    %1581 = vrot.lane.b32.xlu0 %v1579, 64
    %v1582 = vpop.permute.xlu0 %1581
    %v1584 = vmul.f32 %v1566, %v1582
    %1586 = vrot.lane.b32.xlu0 %v1584, 32
    %v1587 = vpop.permute.xlu0 %1586
    %v1588 = vsel %vm244, %v1587, 0
    %1590 = vmatprep.subr.mxu0 0.0
    %1591 = vmatpush1.msra.mxu0 %v215
    %1592 = vmatprep.subr.mxu0 0.0
    %1593 = vmatpush1.msra.mxu0 %v216
    %1594 = vmatprep.subr.mxu0 0.0
    %1595 = vmatpush1.msra.mxu0 %v217
    %1596 = vmatprep.subr.mxu0 0.0
    %1597 = vmatpush1.msra.mxu0 %v218
    %1598 = vmatprep.subr.mxu0 0.0
    %1599 = vmatpush1.msra.mxu0 0.0
    %1600 = vmatprep.subr.mxu0 0.0
    %1601 = vmatpush1.msra.mxu0 0.0
    %1602 = vmatprep.subr.mxu0 0.0
    %1603 = vmatpush1.msra.mxu0 0.0
    %1604 = vmatprep.subr.mxu0 0.0
    %1605 = vmatpush1.msra.mxu0 0.0
    %1606 = vmatprep.subr.mxu0 0.0
    %1607 = vmatpush1.msra.mxu0 0.0
    %1608 = vmatprep.subr.mxu0 0.0
    %1609 = vmatpush1.msra.mxu0 0.0
    %1610 = vmatprep.subr.mxu0 0.0
    %1611 = vmatpush1.msra.mxu0 0.0
    %1612 = vmatprep.subr.mxu0 0.0
    %1613 = vmatpush1.msra.mxu0 0.0
    %1614 = vmatprep.subr.mxu0 0.0
    %1615 = vmatpush1.msra.mxu0 0.0
    %1616 = vmatprep.subr.mxu0 0.0
    %1617 = vmatpush1.msra.mxu0 0.0
    %1618 = vmatprep.subr.mxu0 0.0
    %1619 = vmatpush1.msra.mxu0 0.0
    %1620 = vmatprep.subr.mxu0 0.0
    %1621 = vmatpush1.msra.mxu0 0.0
    %1622 = vmatprep.subr.mxu0 0.0
    %1623 = vmatpush1.msra.mxu0 0.0
    %1624 = vmatprep.subr.mxu0 0.0
    %1625 = vmatpush1.msra.mxu0 0.0
    %1626 = vmatprep.subr.mxu0 0.0
    %1627 = vmatpush1.msra.mxu0 0.0
    %1628 = vmatprep.subr.mxu0 0.0
    %1629 = vmatpush1.msra.mxu0 0.0
    %1630 = vmatprep.subr.mxu0 0.0
    %1631 = vmatpush1.msra.mxu0 0.0
    %1632 = vmatprep.subr.mxu0 0.0
    %1633 = vmatpush1.msra.mxu0 0.0
    %1634 = vmatprep.subr.mxu0 0.0
    %1635 = vmatpush1.msra.mxu0 0.0
    %1636 = vmatprep.subr.mxu0 0.0
    %1637 = vmatpush1.msra.mxu0 0.0
    %1638 = vmatprep.subr.mxu0 0.0
    %1639 = vmatpush1.msra.mxu0 0.0
    %1640 = vmatprep.subr.mxu0 0.0
    %1641 = vmatpush1.msra.mxu0 0.0
    %1642 = vmatprep.subr.mxu0 0.0
    %1643 = vmatpush1.msra.mxu0 0.0
    %1644 = vmatprep.subr.mxu0 0.0
    %1645 = vmatpush1.msra.mxu0 0.0
    %1646 = vmatprep.subr.mxu0 0.0
    %1647 = vmatpush1.msra.mxu0 0.0
    %1648 = vmatprep.subr.mxu0 0.0
    %1649 = vmatpush1.msra.mxu0 0.0
    %1650 = vmatprep.subr.mxu0 0.0
    %1651 = vmatpush1.msra.mxu0 0.0
    %1652 = vmatprep.subr.mxu0 0.0
    %1653 = vmatpush1.msra.mxu0 0.0
    %1654 = vmatprep.mubr.f32.mxu0 0.0
    %1655 = vmatmul.mubr.f32.gmra.mrb[0].mxu0 %v1588
    %v1656 = vpop.f32.mrb[0].mxu0
    %v1657 = vadd.f32 0.0, %v1656
    %v1658 = vpop.f32.mrb[0].mxu0
    %1659 = vdwg.mxu0
    %v1660 = vadd.f32 %v1561, %v1657
    %v1661 = vmul.f32 %v1660, 0.5
    %v1662 = vtanh.pop %v1661
    %v1663 = vadd.f32 %v1662, 1.0
    %v1664 = vmul.f32 %v1663, 0.5
    %v1665 = vtanh.pop %v1660
    %v1666 = vmul.f32 %v1664, %v1409
    %1668 = vrot.lane.b32.xlu0 %v1665, 64
    %v1669 = vpop.permute.xlu0 %1668
    %v1671 = vmul.f32 %v1664, %v1669
    %1673 = vrot.lane.b32.xlu0 %v1671, 32
    %v1674 = vpop.permute.xlu0 %1673
    %v1676 = vadd.f32 %v1666, %v1674
    %v1677 = vtanh.pop %v1676
    %1679 = vrot.lane.b32.xlu0 %v1677, 64
    %v1680 = vpop.permute.xlu0 %1679
    %v1682 = vmul.f32 %v1664, %v1680
    %1683 = vmatprep.subr.mxu0 0.0
    %1684 = vmatpush1.msra.mxu0 %v211
    %1685 = vmatprep.subr.mxu0 0.0
    %1686 = vmatpush1.msra.mxu0 %v212
    %1687 = vmatprep.subr.mxu0 0.0
    %1688 = vmatpush1.msra.mxu0 %v213
    %1689 = vmatprep.subr.mxu0 0.0
    %1690 = vmatpush1.msra.mxu0 %v214
    %1691 = vmatprep.subr.mxu0 0.0
    %1692 = vmatpush1.msra.mxu0 0.0
    %1693 = vmatprep.subr.mxu0 0.0
    %1694 = vmatpush1.msra.mxu0 0.0
    %1695 = vmatprep.subr.mxu0 0.0
    %1696 = vmatpush1.msra.mxu0 0.0
    %1697 = vmatprep.subr.mxu0 0.0
    %1698 = vmatpush1.msra.mxu0 0.0
    %1699 = vmatprep.subr.mxu0 0.0
    %1700 = vmatpush1.msra.mxu0 0.0
    %1701 = vmatprep.subr.mxu0 0.0
    %1702 = vmatpush1.msra.mxu0 0.0
    %1703 = vmatprep.subr.mxu0 0.0
    %1704 = vmatpush1.msra.mxu0 0.0
    %1705 = vmatprep.subr.mxu0 0.0
    %1706 = vmatpush1.msra.mxu0 0.0
    %1707 = vmatprep.subr.mxu0 0.0
    %1708 = vmatpush1.msra.mxu0 0.0
    %1709 = vmatprep.subr.mxu0 0.0
    %1710 = vmatpush1.msra.mxu0 0.0
    %1711 = vmatprep.subr.mxu0 0.0
    %1712 = vmatpush1.msra.mxu0 0.0
    %1713 = vmatprep.subr.mxu0 0.0
    %1714 = vmatpush1.msra.mxu0 0.0
    %1715 = vmatprep.subr.mxu0 0.0
    %1716 = vmatpush1.msra.mxu0 0.0
    %1717 = vmatprep.subr.mxu0 0.0
    %1718 = vmatpush1.msra.mxu0 0.0
    %1719 = vmatprep.subr.mxu0 0.0
    %1720 = vmatpush1.msra.mxu0 0.0
    %1721 = vmatprep.subr.mxu0 0.0
    %1722 = vmatpush1.msra.mxu0 0.0
    %1723 = vmatprep.subr.mxu0 0.0
    %1724 = vmatpush1.msra.mxu0 0.0
    %1725 = vmatprep.subr.mxu0 0.0
    %1726 = vmatpush1.msra.mxu0 0.0
    %1727 = vmatprep.subr.mxu0 0.0
    %1728 = vmatpush1.msra.mxu0 0.0
    %1729 = vmatprep.subr.mxu0 0.0
    %1730 = vmatpush1.msra.mxu0 0.0
    %1731 = vmatprep.subr.mxu0 0.0
    %1732 = vmatpush1.msra.mxu0 0.0
    %1733 = vmatprep.subr.mxu0 0.0
    %1734 = vmatpush1.msra.mxu0 0.0
    %1735 = vmatprep.subr.mxu0 0.0
    %1736 = vmatpush1.msra.mxu0 0.0
    %1737 = vmatprep.subr.mxu0 0.0
    %1738 = vmatpush1.msra.mxu0 0.0
    %1739 = vmatprep.subr.mxu0 0.0
    %1740 = vmatpush1.msra.mxu0 0.0
    %1741 = vmatprep.subr.mxu0 0.0
    %1742 = vmatpush1.msra.mxu0 0.0
    %1743 = vmatprep.subr.mxu0 0.0
    %1744 = vmatpush1.msra.mxu0 0.0
    %1745 = vmatprep.subr.mxu0 0.0
    %1746 = vmatpush1.msra.mxu0 0.0
    %1747 = vmatprep.mubr.f32.mxu0 0.0
    %1748 = vmatmul.mubr.f32.gmra.mrb[0].mxu0 %v1588
    %v1749 = vpop.f32.mrb[0].mxu0
    %v1750 = vadd.f32 0.0, %v1749
    %v1751 = vpop.f32.mrb[0].mxu0
    %1752 = vdwg.mxu0
    %1754 = vrot.lane.b32.xlu0 %v1682, 32
    %v1755 = vpop.permute.xlu0 %1754
    %v1756 = vsel %vm244, %v1755, 0
    %1758 = vmatprep.subr.mxu0 0.0
    %1759 = vmatpush1.msra.mxu0 %v219
    %1760 = vmatprep.subr.mxu0 0.0
    %1761 = vmatpush1.msra.mxu0 %v220
    %1762 = vmatprep.subr.mxu0 0.0
    %1763 = vmatpush1.msra.mxu0 %v221
    %1764 = vmatprep.subr.mxu0 0.0
    %1765 = vmatpush1.msra.mxu0 %v222
    %1766 = vmatprep.subr.mxu0 0.0
    %1767 = vmatpush1.msra.mxu0 0.0
    %1768 = vmatprep.subr.mxu0 0.0
    %1769 = vmatpush1.msra.mxu0 0.0
    %1770 = vmatprep.subr.mxu0 0.0
    %1771 = vmatpush1.msra.mxu0 0.0
    %1772 = vmatprep.subr.mxu0 0.0
    %1773 = vmatpush1.msra.mxu0 0.0
    %1774 = vmatprep.subr.mxu0 0.0
    %1775 = vmatpush1.msra.mxu0 0.0
    %1776 = vmatprep.subr.mxu0 0.0
    %1777 = vmatpush1.msra.mxu0 0.0
    %1778 = vmatprep.subr.mxu0 0.0
    %1779 = vmatpush1.msra.mxu0 0.0
    %1780 = vmatprep.subr.mxu0 0.0
    %1781 = vmatpush1.msra.mxu0 0.0
    %1782 = vmatprep.subr.mxu0 0.0
    %1783 = vmatpush1.msra.mxu0 0.0
    %1784 = vmatprep.subr.mxu0 0.0
    %1785 = vmatpush1.msra.mxu0 0.0
    %1786 = vmatprep.subr.mxu0 0.0
    %1787 = vmatpush1.msra.mxu0 0.0
    %1788 = vmatprep.subr.mxu0 0.0
    %1789 = vmatpush1.msra.mxu0 0.0
    %1790 = vmatprep.subr.mxu0 0.0
    %1791 = vmatpush1.msra.mxu0 0.0
    %1792 = vmatprep.subr.mxu0 0.0
    %1793 = vmatpush1.msra.mxu0 0.0
    %1794 = vmatprep.subr.mxu0 0.0
    %1795 = vmatpush1.msra.mxu0 0.0
    %1796 = vmatprep.subr.mxu0 0.0
    %1797 = vmatpush1.msra.mxu0 0.0
    %1798 = vmatprep.subr.mxu0 0.0
    %1799 = vmatpush1.msra.mxu0 0.0
    %1800 = vmatprep.subr.mxu0 0.0
    %1801 = vmatpush1.msra.mxu0 0.0
    %1802 = vmatprep.subr.mxu0 0.0
    %1803 = vmatpush1.msra.mxu0 0.0
    %1804 = vmatprep.subr.mxu0 0.0
    %1805 = vmatpush1.msra.mxu0 0.0
    %1806 = vmatprep.subr.mxu0 0.0
    %1807 = vmatpush1.msra.mxu0 0.0
    %1808 = vmatprep.subr.mxu0 0.0
    %1809 = vmatpush1.msra.mxu0 0.0
    %1810 = vmatprep.subr.mxu0 0.0
    %1811 = vmatpush1.msra.mxu0 0.0
    %1812 = vmatprep.subr.mxu0 0.0
    %1813 = vmatpush1.msra.mxu0 0.0
    %1814 = vmatprep.subr.mxu0 0.0
    %1815 = vmatpush1.msra.mxu0 0.0
    %1816 = vmatprep.subr.mxu0 0.0
    %1817 = vmatpush1.msra.mxu0 0.0
    %1818 = vmatprep.subr.mxu0 0.0
    %1819 = vmatpush1.msra.mxu0 0.0
    %1820 = vmatprep.subr.mxu0 0.0
    %1821 = vmatpush1.msra.mxu0 0.0
    %1822 = vmatprep.mubr.f32.mxu0 0.0
    %1823 = vmatmul.mubr.f32.gmra.mrb[0].mxu0 %v1756
    %v1824 = vpop.f32.mrb[0].mxu0
    %v1825 = vadd.f32 0.0, %v1824
    %v1826 = vpop.f32.mrb[0].mxu0
    %1827 = vdwg.mxu0
    %v1828 = vadd.f32 %v321, %v1825
    %v1829 = vadd.f32 %v203, %v1750
    %v1830 = vmul.f32 %v1829, 0.5
    %v1831 = vtanh.pop %v1830
    %v1832 = vadd.f32 %v1831, 1.0
    %v1833 = vmul.f32 %v1832, 0.5
    %v1834 = vtanh.pop %v1829
    %v1835 = vmul.f32 %v1833, %v1578
    %1837 = vrot.lane.b32.xlu0 %v1834, 64
    %v1838 = vpop.permute.xlu0 %1837
    %v1840 = vmul.f32 %v1833, %v1838
    %1842 = vrot.lane.b32.xlu0 %v1840, 32
    %v1843 = vpop.permute.xlu0 %1842
    %v1845 = vadd.f32 %v1835, %v1843
    %v1846 = vtanh.pop %v1845
    %1848 = vrot.lane.b32.xlu0 %v1846, 64
    %v1849 = vpop.permute.xlu0 %1848
    %v1851 = vmul.f32 %v1833, %v1849
    %1853 = vrot.lane.b32.xlu0 %v1851, 32
    %v1854 = vpop.permute.xlu0 %1853
    %v1855 = vsel %vm244, %v1854, 0
    %1857 = vmatprep.subr.mxu0 0.0
    %1858 = vmatpush1.msra.mxu0 %v215
    %1859 = vmatprep.subr.mxu0 0.0
    %1860 = vmatpush1.msra.mxu0 %v216
    %1861 = vmatprep.subr.mxu0 0.0
    %1862 = vmatpush1.msra.mxu0 %v217
    %1863 = vmatprep.subr.mxu0 0.0
    %1864 = vmatpush1.msra.mxu0 %v218
    %1865 = vmatprep.subr.mxu0 0.0
    %1866 = vmatpush1.msra.mxu0 0.0
    %1867 = vmatprep.subr.mxu0 0.0
    %1868 = vmatpush1.msra.mxu0 0.0
    %1869 = vmatprep.subr.mxu0 0.0
    %1870 = vmatpush1.msra.mxu0 0.0
    %1871 = vmatprep.subr.mxu0 0.0
    %1872 = vmatpush1.msra.mxu0 0.0
    %1873 = vmatprep.subr.mxu0 0.0
    %1874 = vmatpush1.msra.mxu0 0.0
    %1875 = vmatprep.subr.mxu0 0.0
    %1876 = vmatpush1.msra.mxu0 0.0
    %1877 = vmatprep.subr.mxu0 0.0
    %1878 = vmatpush1.msra.mxu0 0.0
    %1879 = vmatprep.subr.mxu0 0.0
    %1880 = vmatpush1.msra.mxu0 0.0
    %1881 = vmatprep.subr.mxu0 0.0
    %1882 = vmatpush1.msra.mxu0 0.0
    %1883 = vmatprep.subr.mxu0 0.0
    %1884 = vmatpush1.msra.mxu0 0.0
    %1885 = vmatprep.subr.mxu0 0.0
    %1886 = vmatpush1.msra.mxu0 0.0
    %1887 = vmatprep.subr.mxu0 0.0
    %1888 = vmatpush1.msra.mxu0 0.0
    %1889 = vmatprep.subr.mxu0 0.0
    %1890 = vmatpush1.msra.mxu0 0.0
    %1891 = vmatprep.subr.mxu0 0.0
    %1892 = vmatpush1.msra.mxu0 0.0
    %1893 = vmatprep.subr.mxu0 0.0
    %1894 = vmatpush1.msra.mxu0 0.0
    %1895 = vmatprep.subr.mxu0 0.0
    %1896 = vmatpush1.msra.mxu0 0.0
    %1897 = vmatprep.subr.mxu0 0.0
    %1898 = vmatpush1.msra.mxu0 0.0
    %1899 = vmatprep.subr.mxu0 0.0
    %1900 = vmatpush1.msra.mxu0 0.0
    %1901 = vmatprep.subr.mxu0 0.0
    %1902 = vmatpush1.msra.mxu0 0.0
    %1903 = vmatprep.subr.mxu0 0.0
    %1904 = vmatpush1.msra.mxu0 0.0
    %1905 = vmatprep.subr.mxu0 0.0
    %1906 = vmatpush1.msra.mxu0 0.0
    %1907 = vmatprep.subr.mxu0 0.0
    %1908 = vmatpush1.msra.mxu0 0.0
    %1909 = vmatprep.subr.mxu0 0.0
    %1910 = vmatpush1.msra.mxu0 0.0
    %1911 = vmatprep.subr.mxu0 0.0
    %1912 = vmatpush1.msra.mxu0 0.0
    %1913 = vmatprep.subr.mxu0 0.0
    %1914 = vmatpush1.msra.mxu0 0.0
    %1915 = vmatprep.subr.mxu0 0.0
    %1916 = vmatpush1.msra.mxu0 0.0
    %1917 = vmatprep.subr.mxu0 0.0
    %1918 = vmatpush1.msra.mxu0 0.0
    %1919 = vmatprep.subr.mxu0 0.0
    %1920 = vmatpush1.msra.mxu0 0.0
    %1921 = vmatprep.mubr.f32.mxu0 0.0
    %1922 = vmatmul.mubr.f32.gmra.mrb[0].mxu0 %v1855
    %v1923 = vpop.f32.mrb[0].mxu0
    %v1924 = vadd.f32 0.0, %v1923
    %v1925 = vpop.f32.mrb[0].mxu0
    %1926 = vdwg.mxu0
    %v1927 = vadd.f32 %v1828, %v1924
    %v1928 = vmul.f32 %v1927, 0.5
    %v1929 = vtanh.pop %v1928
    %v1930 = vadd.f32 %v1929, 1.0
    %v1931 = vmul.f32 %v1930, 0.5
    %v1932 = vtanh.pop %v1927
    %v1933 = vmul.f32 %v1931, %v1676
    %1935 = vrot.lane.b32.xlu0 %v1932, 64
    %v1936 = vpop.permute.xlu0 %1935
    %v1938 = vmul.f32 %v1931, %v1936
    %1940 = vrot.lane.b32.xlu0 %v1938, 32
    %v1941 = vpop.permute.xlu0 %1940
    %v1943 = vadd.f32 %v1933, %v1941
    %v1944 = vtanh.pop %v1943
    %1946 = vrot.lane.b32.xlu0 %v1944, 64
    %v1947 = vpop.permute.xlu0 %1946
    %v1949 = vmul.f32 %v1931, %v1947
    %1950 = vmatprep.subr.mxu0 0.0
    %1951 = vmatpush1.msra.mxu0 %v211
    %1952 = vmatprep.subr.mxu0 0.0
    %1953 = vmatpush1.msra.mxu0 %v212
    %1954 = vmatprep.subr.mxu0 0.0
    %1955 = vmatpush1.msra.mxu0 %v213
    %1956 = vmatprep.subr.mxu0 0.0
    %1957 = vmatpush1.msra.mxu0 %v214
    %1958 = vmatprep.subr.mxu0 0.0
    %1959 = vmatpush1.msra.mxu0 0.0
    %1960 = vmatprep.subr.mxu0 0.0
    %1961 = vmatpush1.msra.mxu0 0.0
    %1962 = vmatprep.subr.mxu0 0.0
    %1963 = vmatpush1.msra.mxu0 0.0
    %1964 = vmatprep.subr.mxu0 0.0
    %1965 = vmatpush1.msra.mxu0 0.0
    %1966 = vmatprep.subr.mxu0 0.0
    %1967 = vmatpush1.msra.mxu0 0.0
    %1968 = vmatprep.subr.mxu0 0.0
    %1969 = vmatpush1.msra.mxu0 0.0
    %1970 = vmatprep.subr.mxu0 0.0
    %1971 = vmatpush1.msra.mxu0 0.0
    %1972 = vmatprep.subr.mxu0 0.0
    %1973 = vmatpush1.msra.mxu0 0.0
    %1974 = vmatprep.subr.mxu0 0.0
    %1975 = vmatpush1.msra.mxu0 0.0
    %1976 = vmatprep.subr.mxu0 0.0
    %1977 = vmatpush1.msra.mxu0 0.0
    %1978 = vmatprep.subr.mxu0 0.0
    %1979 = vmatpush1.msra.mxu0 0.0
    %1980 = vmatprep.subr.mxu0 0.0
    %1981 = vmatpush1.msra.mxu0 0.0
    %1982 = vmatprep.subr.mxu0 0.0
    %1983 = vmatpush1.msra.mxu0 0.0
    %1984 = vmatprep.subr.mxu0 0.0
    %1985 = vmatpush1.msra.mxu0 0.0
    %1986 = vmatprep.subr.mxu0 0.0
    %1987 = vmatpush1.msra.mxu0 0.0
    %1988 = vmatprep.subr.mxu0 0.0
    %1989 = vmatpush1.msra.mxu0 0.0
    %1990 = vmatprep.subr.mxu0 0.0
    %1991 = vmatpush1.msra.mxu0 0.0
    %1992 = vmatprep.subr.mxu0 0.0
    %1993 = vmatpush1.msra.mxu0 0.0
    %1994 = vmatprep.subr.mxu0 0.0
    %1995 = vmatpush1.msra.mxu0 0.0
    %1996 = vmatprep.subr.mxu0 0.0
    %1997 = vmatpush1.msra.mxu0 0.0
    %1998 = vmatprep.subr.mxu0 0.0
    %1999 = vmatpush1.msra.mxu0 0.0
    %2000 = vmatprep.subr.mxu0 0.0
    %2001 = vmatpush1.msra.mxu0 0.0
    %2002 = vmatprep.subr.mxu0 0.0
    %2003 = vmatpush1.msra.mxu0 0.0
    %2004 = vmatprep.subr.mxu0 0.0
    %2005 = vmatpush1.msra.mxu0 0.0
    %2006 = vmatprep.subr.mxu0 0.0
    %2007 = vmatpush1.msra.mxu0 0.0
    %2008 = vmatprep.subr.mxu0 0.0
    %2009 = vmatpush1.msra.mxu0 0.0
    %2010 = vmatprep.subr.mxu0 0.0
    %2011 = vmatpush1.msra.mxu0 0.0
    %2012 = vmatprep.subr.mxu0 0.0
    %2013 = vmatpush1.msra.mxu0 0.0
    %2014 = vmatprep.mubr.f32.mxu0 0.0
    %2015 = vmatmul.mubr.f32.gmra.mrb[0].mxu0 %v1855
    %v2016 = vpop.f32.mrb[0].mxu0
    %v2017 = vadd.f32 0.0, %v2016
    %v2018 = vpop.f32.mrb[0].mxu0
    %2019 = vdwg.mxu0
    %2021 = vrot.lane.b32.xlu0 %v1949, 32
    %v2022 = vpop.permute.xlu0 %2021
    %v2023 = vsel %vm244, %v2022, 0
    %2025 = vmatprep.subr.mxu0 0.0
    %2026 = vmatpush1.msra.mxu0 %v219
    %2027 = vmatprep.subr.mxu0 0.0
    %2028 = vmatpush1.msra.mxu0 %v220
    %2029 = vmatprep.subr.mxu0 0.0
    %2030 = vmatpush1.msra.mxu0 %v221
    %2031 = vmatprep.subr.mxu0 0.0
    %2032 = vmatpush1.msra.mxu0 %v222
    %2033 = vmatprep.subr.mxu0 0.0
    %2034 = vmatpush1.msra.mxu0 0.0
    %2035 = vmatprep.subr.mxu0 0.0
    %2036 = vmatpush1.msra.mxu0 0.0
    %2037 = vmatprep.subr.mxu0 0.0
    %2038 = vmatpush1.msra.mxu0 0.0
    %2039 = vmatprep.subr.mxu0 0.0
    %2040 = vmatpush1.msra.mxu0 0.0
    %2041 = vmatprep.subr.mxu0 0.0
    %2042 = vmatpush1.msra.mxu0 0.0
    %2043 = vmatprep.subr.mxu0 0.0
    %2044 = vmatpush1.msra.mxu0 0.0
    %2045 = vmatprep.subr.mxu0 0.0
    %2046 = vmatpush1.msra.mxu0 0.0
    %2047 = vmatprep.subr.mxu0 0.0
    %2048 = vmatpush1.msra.mxu0 0.0
    %2049 = vmatprep.subr.mxu0 0.0
    %2050 = vmatpush1.msra.mxu0 0.0
    %2051 = vmatprep.subr.mxu0 0.0
    %2052 = vmatpush1.msra.mxu0 0.0
    %2053 = vmatprep.subr.mxu0 0.0
    %2054 = vmatpush1.msra.mxu0 0.0
    %2055 = vmatprep.subr.mxu0 0.0
    %2056 = vmatpush1.msra.mxu0 0.0
    %2057 = vmatprep.subr.mxu0 0.0
    %2058 = vmatpush1.msra.mxu0 0.0
    %2059 = vmatprep.subr.mxu0 0.0
    %2060 = vmatpush1.msra.mxu0 0.0
    %2061 = vmatprep.subr.mxu0 0.0
    %2062 = vmatpush1.msra.mxu0 0.0
    %2063 = vmatprep.subr.mxu0 0.0
    %2064 = vmatpush1.msra.mxu0 0.0
    %2065 = vmatprep.subr.mxu0 0.0
    %2066 = vmatpush1.msra.mxu0 0.0
    %2067 = vmatprep.subr.mxu0 0.0
    %2068 = vmatpush1.msra.mxu0 0.0
    %2069 = vmatprep.subr.mxu0 0.0
    %2070 = vmatpush1.msra.mxu0 0.0
    %2071 = vmatprep.subr.mxu0 0.0
    %2072 = vmatpush1.msra.mxu0 0.0
    %2073 = vmatprep.subr.mxu0 0.0
    %2074 = vmatpush1.msra.mxu0 0.0
    %2075 = vmatprep.subr.mxu0 0.0
    %2076 = vmatpush1.msra.mxu0 0.0
    %2077 = vmatprep.subr.mxu0 0.0
    %2078 = vmatpush1.msra.mxu0 0.0
    %2079 = vmatprep.subr.mxu0 0.0
    %2080 = vmatpush1.msra.mxu0 0.0
    %2081 = vmatprep.subr.mxu0 0.0
    %2082 = vmatpush1.msra.mxu0 0.0
    %2083 = vmatprep.subr.mxu0 0.0
    %2084 = vmatpush1.msra.mxu0 0.0
    %2085 = vmatprep.subr.mxu0 0.0
    %2086 = vmatpush1.msra.mxu0 0.0
    %2087 = vmatprep.subr.mxu0 0.0
    %2088 = vmatpush1.msra.mxu0 0.0
    %2089 = vmatprep.mubr.f32.mxu0 0.0
    %2090 = vmatmul.mubr.f32.gmra.mrb[0].mxu0 %v2023
    %v2091 = vpop.f32.mrb[0].mxu0
    %v2092 = vadd.f32 0.0, %v2091
    %v2093 = vpop.f32.mrb[0].mxu0
    %2094 = vdwg.mxu0
    %v2095 = vadd.f32 %v321, %v2092
    %v2096 = vadd.f32 %v208, %v2017
    %v2097 = vmul.f32 %v2096, 0.5
    %v2098 = vtanh.pop %v2097
    %v2099 = vadd.f32 %v2098, 1.0
    %v2100 = vmul.f32 %v2099, 0.5
    %v2101 = vtanh.pop %v2096
    %v2102 = vmul.f32 %v2100, %v1845
    %2104 = vrot.lane.b32.xlu0 %v2101, 64
    %v2105 = vpop.permute.xlu0 %2104
    %v2107 = vmul.f32 %v2100, %v2105
    %2109 = vrot.lane.b32.xlu0 %v2107, 32
    %v2110 = vpop.permute.xlu0 %2109
    %v2112 = vadd.f32 %v2102, %v2110
    %v2113 = vtanh.pop %v2112
    %2115 = vrot.lane.b32.xlu0 %v2113, 64
    %v2116 = vpop.permute.xlu0 %2115
    %v2118 = vmul.f32 %v2100, %v2116
    %2120 = vrot.lane.b32.xlu0 %v2118, 32
    %v2121 = vpop.permute.xlu0 %2120
    %v2122 = vsel %vm244, %v2121, 0
    %2124 = vmatprep.subr.mxu0 0.0
    %2125 = vmatpush1.msra.mxu0 %v215
    %2126 = vmatprep.subr.mxu0 0.0
    %2127 = vmatpush1.msra.mxu0 %v216
    %2128 = vmatprep.subr.mxu0 0.0
    %2129 = vmatpush1.msra.mxu0 %v217
    %2130 = vmatprep.subr.mxu0 0.0
    %2131 = vmatpush1.msra.mxu0 %v218
    %2132 = vmatprep.subr.mxu0 0.0
    %2133 = vmatpush1.msra.mxu0 0.0
    %2134 = vmatprep.subr.mxu0 0.0
    %2135 = vmatpush1.msra.mxu0 0.0
    %2136 = vmatprep.subr.mxu0 0.0
    %2137 = vmatpush1.msra.mxu0 0.0
    %2138 = vmatprep.subr.mxu0 0.0
    %2139 = vmatpush1.msra.mxu0 0.0
    %2140 = vmatprep.subr.mxu0 0.0
    %2141 = vmatpush1.msra.mxu0 0.0
    %2142 = vmatprep.subr.mxu0 0.0
    %2143 = vmatpush1.msra.mxu0 0.0
    %2144 = vmatprep.subr.mxu0 0.0
    %2145 = vmatpush1.msra.mxu0 0.0
    %2146 = vmatprep.subr.mxu0 0.0
    %2147 = vmatpush1.msra.mxu0 0.0
    %2148 = vmatprep.subr.mxu0 0.0
    %2149 = vmatpush1.msra.mxu0 0.0
    %2150 = vmatprep.subr.mxu0 0.0
    %2151 = vmatpush1.msra.mxu0 0.0
    %2152 = vmatprep.subr.mxu0 0.0
    %2153 = vmatpush1.msra.mxu0 0.0
    %2154 = vmatprep.subr.mxu0 0.0
    %2155 = vmatpush1.msra.mxu0 0.0
    %2156 = vmatprep.subr.mxu0 0.0
    %2157 = vmatpush1.msra.mxu0 0.0
    %2158 = vmatprep.subr.mxu0 0.0
    %2159 = vmatpush1.msra.mxu0 0.0
    %2160 = vmatprep.subr.mxu0 0.0
    %2161 = vmatpush1.msra.mxu0 0.0
    %2162 = vmatprep.subr.mxu0 0.0
    %2163 = vmatpush1.msra.mxu0 0.0
    %2164 = vmatprep.subr.mxu0 0.0
    %2165 = vmatpush1.msra.mxu0 0.0
    %2166 = vmatprep.subr.mxu0 0.0
    %2167 = vmatpush1.msra.mxu0 0.0
    %2168 = vmatprep.subr.mxu0 0.0
    %2169 = vmatpush1.msra.mxu0 0.0
    %2170 = vmatprep.subr.mxu0 0.0
    %2171 = vmatpush1.msra.mxu0 0.0
    %2172 = vmatprep.subr.mxu0 0.0
    %2173 = vmatpush1.msra.mxu0 0.0
    %2174 = vmatprep.subr.mxu0 0.0
    %2175 = vmatpush1.msra.mxu0 0.0
    %2176 = vmatprep.subr.mxu0 0.0
    %2177 = vmatpush1.msra.mxu0 0.0
    %2178 = vmatprep.subr.mxu0 0.0
    %2179 = vmatpush1.msra.mxu0 0.0
    %2180 = vmatprep.subr.mxu0 0.0
    %2181 = vmatpush1.msra.mxu0 0.0
    %2182 = vmatprep.subr.mxu0 0.0
    %2183 = vmatpush1.msra.mxu0 0.0
    %2184 = vmatprep.subr.mxu0 0.0
    %2185 = vmatpush1.msra.mxu0 0.0
    %2186 = vmatprep.subr.mxu0 0.0
    %2187 = vmatpush1.msra.mxu0 0.0
    %2188 = vmatprep.mubr.f32.mxu0 0.0
    %2189 = vmatmul.mubr.f32.gmra.mrb[0].mxu0 %v2122
    %v2190 = vpop.f32.mrb[0].mxu0
    %v2191 = vadd.f32 0.0, %v2190
    %v2192 = vpop.f32.mrb[0].mxu0
    %2193 = vdwg.mxu0
    %v2194 = vadd.f32 %v2095, %v2191
    %v2195 = vmul.f32 %v2194, 0.5
    %v2196 = vtanh.pop %v2195
    %v2197 = vadd.f32 %v2196, 1.0
    %v2198 = vmul.f32 %v2197, 0.5
    %v2199 = vtanh.pop %v2194
    %v2200 = vmul.f32 %v2198, %v1943
    %2202 = vrot.lane.b32.xlu0 %v2199, 64
    %v2203 = vpop.permute.xlu0 %2202
    %v2205 = vmul.f32 %v2198, %v2203
    %2207 = vrot.lane.b32.xlu0 %v2205, 32
    %v2208 = vpop.permute.xlu0 %2207
    %v2210 = vadd.f32 %v2200, %v2208
    %v2211 = vtanh.pop %v2210
    %2213 = vrot.lane.b32.xlu0 %v2211, 64
    %v2214 = vpop.permute.xlu0 %2213
    %v2216 = vmul.f32 %v2198, %v2214
    %v2218 = vlaneseq
    %v2219 = vshrl.u32 %v2218, 7
    %v2220 = vsub.s32 0, %v2219
    %v2221 = vrot.slane %v224, %v2220
    %2222 = vrot.lane.b32.xlu0 %v2221, 96
    %v2223 = vpop.permute.xlu0 %2222
    %v2225 = vmul.f32 %v339, %v2223
    %2227 = vrot.lane.b32.xlu0 %v2225, 32
    %v2228 = vpop.permute.xlu0 %2227
    %v2230 = vsel %vm244, %v2228, 0.0
    %2231 = vadd.xlane.f32.xlu0 %v2230
    %v2232 = vpop.xlane.xlu0 %2231
    %v2233 = vmul.f32 %v614, %v2223
    %2235 = vrot.lane.b32.xlu0 %v2233, 32
    %v2236 = vpop.permute.xlu0 %2235
    %v2238 = vsel %vm244, %v2236, 0.0
    %2239 = vadd.xlane.f32.xlu0 %v2238
    %v2240 = vpop.xlane.xlu0 %2239
    %v2241 = vmul.f32 %v881, %v2223
    %2243 = vrot.lane.b32.xlu0 %v2241, 32
    %v2244 = vpop.permute.xlu0 %2243
    %v2246 = vsel %vm244, %v2244, 0.0
    %2247 = vadd.xlane.f32.xlu0 %v2246
    %v2248 = vpop.xlane.xlu0 %2247
    %v2249 = vmul.f32 %v1148, %v2223
    %2251 = vrot.lane.b32.xlu0 %v2249, 32
    %v2252 = vpop.permute.xlu0 %2251
    %v2254 = vsel %vm244, %v2252, 0.0
    %2255 = vadd.xlane.f32.xlu0 %v2254
    %v2256 = vpop.xlane.xlu0 %2255
    %v2257 = vmul.f32 %v1415, %v2223
    %2259 = vrot.lane.b32.xlu0 %v2257, 32
    %v2260 = vpop.permute.xlu0 %2259
    %v2262 = vsel %vm244, %v2260, 0.0
    %2263 = vadd.xlane.f32.xlu0 %v2262
    %v2264 = vpop.xlane.xlu0 %2263
    %v2265 = vmul.f32 %v1682, %v2223
    %2267 = vrot.lane.b32.xlu0 %v2265, 32
    %v2268 = vpop.permute.xlu0 %2267
    %v2270 = vsel %vm244, %v2268, 0.0
    %2271 = vadd.xlane.f32.xlu0 %v2270
    %v2272 = vpop.xlane.xlu0 %2271
    %v2273 = vmul.f32 %v1949, %v2223
    %2275 = vrot.lane.b32.xlu0 %v2273, 32
    %v2276 = vpop.permute.xlu0 %2275
    %v2278 = vsel %vm244, %v2276, 0.0
    %2279 = vadd.xlane.f32.xlu0 %v2278
    %v2280 = vpop.xlane.xlu0 %2279
    %v2281 = vmul.f32 %v2216, %v2223
    %2283 = vrot.lane.b32.xlu0 %v2281, 32
    %v2284 = vpop.permute.xlu0 %2283
    %v2286 = vsel %vm244, %v2284, 0.0
    %2287 = vadd.xlane.f32.xlu0 %v2286
    %v2288 = vpop.xlane.xlu0 %2287
    %v2289 = vmax.f32 %v2232, %v2240
    %v2290 = vmax.f32 %v2289, %v2248
    %v2291 = vmax.f32 %v2290, %v2256
    %v2292 = vmax.f32 %v2291, %v2264
    %v2293 = vmax.f32 %v2292, %v2272
    %v2294 = vmax.f32 %v2293, %v2280
    %v2295 = vmax.f32 %v2294, %v2288
    %v2296 = vsub.f32 %v2232, %v2295
    %v2297 = vmul.f32 %v2296, 1.442695
    %v2298 = vpow.pop %v2297
    %v2299 = vsub.f32 %v2240, %v2295
    %v2300 = vmul.f32 %v2299, 1.442695
    %v2301 = vpow.pop %v2300
    %v2302 = vsub.f32 %v2248, %v2295
    %v2303 = vmul.f32 %v2302, 1.442695
    %v2304 = vpow.pop %v2303
    %v2305 = vsub.f32 %v2256, %v2295
    %v2306 = vmul.f32 %v2305, 1.442695
    %v2307 = vpow.pop %v2306
    %v2308 = vsub.f32 %v2264, %v2295
    %v2309 = vmul.f32 %v2308, 1.442695
    %v2310 = vpow.pop %v2309
    %v2311 = vsub.f32 %v2272, %v2295
    %v2312 = vmul.f32 %v2311, 1.442695
    %v2313 = vpow.pop %v2312
    %v2314 = vsub.f32 %v2280, %v2295
    %v2315 = vmul.f32 %v2314, 1.442695
    %v2316 = vpow.pop %v2315
    %v2317 = vsub.f32 %v2288, %v2295
    %v2318 = vmul.f32 %v2317, 1.442695
    %v2319 = vpow.pop %v2318
    %v2320 = vmul.f32 %v2298, %v339
    %v2321 = vadd.f32 %v2298, %v2301
    %v2322 = vmul.f32 %v2301, %v614
    %v2323 = vadd.f32 %v2320, %v2322
    %v2324 = vadd.f32 %v2321, %v2304
    %v2325 = vmul.f32 %v2304, %v881
    %v2326 = vadd.f32 %v2323, %v2325
    %v2327 = vadd.f32 %v2324, %v2307
    %v2328 = vmul.f32 %v2307, %v1148
    %v2329 = vadd.f32 %v2326, %v2328
    %v2330 = vadd.f32 %v2327, %v2310
    %v2331 = vmul.f32 %v2310, %v1415
    %v2332 = vadd.f32 %v2329, %v2331
    %v2333 = vadd.f32 %v2330, %v2313
    %v2334 = vmul.f32 %v2313, %v1682
    %v2335 = vadd.f32 %v2332, %v2334
    %v2336 = vadd.f32 %v2333, %v2316
    %v2337 = vmul.f32 %v2316, %v1949
    %v2338 = vadd.f32 %v2335, %v2337
    %v2339 = vadd.f32 %v2336, %v2319
    %v2340 = vmul.f32 %v2319, %v2216
    %v2341 = vadd.f32 %v2338, %v2340
    %v2342 = vrcp.pop %v2339
    %v2343 = vmul.f32 %v2341, %v2342
    %v2344 = vld [vmem:[#allocation5] sm:$0xff]
    %v2345 = vld [vmem:[#allocation5 + $0x8] sm:$0xff]
    %v2346 = vld [vmem:[#allocation5 + $0x10] sm:$0xff]
    %v2347 = vld [vmem:[#allocation5 + $0x18] sm:$0xff]
    %v2348 = vld [vmem:[%s9] sm:$0x1]
    %v2350 = vlaneseq
    %v2351 = vshrl.u32 %v2350, 7
    %v2352 = vsub.s32 0, %v2351
    %v2353 = vrot.slane %v2348, %v2352
    %2356 = vrot.lane.b32.xlu0 %v2343, 32
    %v2357 = vpop.permute.xlu0 %2356
    %v2358 = vsel %vm244, %v2357, 0
    %2360 = vmatprep.subr.mxu0 0.0
    %2361 = vmatpush1.msra.mxu0 %v2344
    %2362 = vmatprep.subr.mxu0 0.0
    %2363 = vmatpush1.msra.mxu0 %v2345
    %2364 = vmatprep.subr.mxu0 0.0
    %2365 = vmatpush1.msra.mxu0 %v2346
    %2366 = vmatprep.subr.mxu0 0.0
    %2367 = vmatpush1.msra.mxu0 %v2347
    %2368 = vmatprep.subr.mxu0 0.0
    %2369 = vmatpush1.msra.mxu0 0.0
    %2370 = vmatprep.subr.mxu0 0.0
    %2371 = vmatpush1.msra.mxu0 0.0
    %2372 = vmatprep.subr.mxu0 0.0
    %2373 = vmatpush1.msra.mxu0 0.0
    %2374 = vmatprep.subr.mxu0 0.0
    %2375 = vmatpush1.msra.mxu0 0.0
    %2376 = vmatprep.subr.mxu0 0.0
    %2377 = vmatpush1.msra.mxu0 0.0
    %2378 = vmatprep.subr.mxu0 0.0
    %2379 = vmatpush1.msra.mxu0 0.0
    %2380 = vmatprep.subr.mxu0 0.0
    %2381 = vmatpush1.msra.mxu0 0.0
    %2382 = vmatprep.subr.mxu0 0.0
    %2383 = vmatpush1.msra.mxu0 0.0
    %2384 = vmatprep.subr.mxu0 0.0
    %2385 = vmatpush1.msra.mxu0 0.0
    %2386 = vmatprep.subr.mxu0 0.0
    %2387 = vmatpush1.msra.mxu0 0.0
    %2388 = vmatprep.subr.mxu0 0.0
    %2389 = vmatpush1.msra.mxu0 0.0
    %2390 = vmatprep.subr.mxu0 0.0
    %2391 = vmatpush1.msra.mxu0 0.0
    %2392 = vmatprep.subr.mxu0 0.0
    %2393 = vmatpush1.msra.mxu0 0.0
    %2394 = vmatprep.subr.mxu0 0.0
    %2395 = vmatpush1.msra.mxu0 0.0
    %2396 = vmatprep.subr.mxu0 0.0
    %2397 = vmatpush1.msra.mxu0 0.0
    %2398 = vmatprep.subr.mxu0 0.0
    %2399 = vmatpush1.msra.mxu0 0.0
    %2400 = vmatprep.subr.mxu0 0.0
    %2401 = vmatpush1.msra.mxu0 0.0
    %2402 = vmatprep.subr.mxu0 0.0
    %2403 = vmatpush1.msra.mxu0 0.0
    %2404 = vmatprep.subr.mxu0 0.0
    %2405 = vmatpush1.msra.mxu0 0.0
    %2406 = vmatprep.subr.mxu0 0.0
    %2407 = vmatpush1.msra.mxu0 0.0
    %2408 = vmatprep.subr.mxu0 0.0
    %2409 = vmatpush1.msra.mxu0 0.0
    %2410 = vmatprep.subr.mxu0 0.0
    %2411 = vmatpush1.msra.mxu0 0.0
    %2412 = vmatprep.subr.mxu0 0.0
    %2413 = vmatpush1.msra.mxu0 0.0
    %2414 = vmatprep.subr.mxu0 0.0
    %2415 = vmatpush1.msra.mxu0 0.0
    %2416 = vmatprep.subr.mxu0 0.0
    %2417 = vmatpush1.msra.mxu0 0.0
    %2418 = vmatprep.subr.mxu0 0.0
    %2419 = vmatpush1.msra.mxu0 0.0
    %2420 = vmatprep.subr.mxu0 0.0
    %2421 = vmatpush1.msra.mxu0 0.0
    %2422 = vmatprep.subr.mxu0 0.0
    %2423 = vmatpush1.msra.mxu0 0.0
    %2424 = vmatprep.mubr.f32.mxu0 0.0
    %2425 = vmatmul.mubr.f32.gmra.mrb[0].mxu0 %v2358
    %v2426 = vpop.f32.mrb[0].mxu0
    %v2427 = vadd.f32 %v2353, %v2426
    %v2428 = vpop.f32.mrb[0].mxu0
    %2429 = vdwg.mxu0
    %2430 = vst [vmem:[#allocation7] sm:$0xff] %v2427
    // Predicated region
    $region50: #{tpu_custom_call.1} parent=1 // pred_check
      _
    $region51: #{tpu_custom_call.1} parent=1 // pred_check_branch
      %2432 = sbr.rel (0) target = $region53
    $region52: #{tpu_custom_call.1} parent=1 // pred_region
      %s2434 = ssub.s32 128, 128
      %2435 = vsyncadd [#allocation4], %s2434
      %s2437 = sshll.u32 [#allocation7], 4
      %s2438 = int_to_ptr.vmem [resolvable:$true] %s2437
      %2440 = dma.vmem_to_hbm [thread:$0]  %s2438, 128, %s10, [#allocation4]
    $region53: #{tpu_custom_call.1} parent=1 // pred_fallthru
      _
    // Predicated region
    $region54: #{tpu_custom_call.1} parent=1 // pred_check
      _
    $region55: #{tpu_custom_call.1} parent=1 // pred_check_branch
      %2442 = sbr.rel (0) target = $region57
    $region56: #{tpu_custom_call.1} parent=1 // pred_region
      %2443 = dma.done [#allocation4], 128
    $region57: #{tpu_custom_call.1} parent=1 // pred_fallthru
      _
    %2444 = vsyncpa [#allocation3], 1
    %2445 = vsyncpa [#allocation6], 1
    %2446 = vsyncpa [#allocation4], 1

</llo_original>
